<compile_context>
chip_gen: v7x
topology: tpu7x:2x2x1
jax: 0.10.0
libtpu: 0.0.40
codegen_flags: <defaults>
</compile_context>

<pallas_src>
import functools

import jax
import jax.numpy as jnp
from jax.experimental import pallas as pl
from jax.experimental.pallas import tpu as pltpu


def _conv5x5s2_kernel(x_ref, w_ref, b_ref, o_ref, acc_ref):
    """One (channel-tile, image, row-block) step.

    x_ref  : (TM+2, Wo_pad+2, C4p)  bf16  s2d rows for this row-block (+2 halo rows)
    w_ref  : (3, 3*C4p, TN)         bf16  per-dy weights, dx folded into K
    b_ref  : (1, TN)                f32
    o_ref  : (TM*Wo_pad, TN)        bf16
    acc_ref: (TM*Wo_pad, TN)        f32   VMEM accumulator
    """
    tmp2, w2p, c4p = x_ref.shape
    tm, wo = tmp2 - 2, w2p - 2
    for dy in range(3):                                        # static unroll: 3 MXU dots
        lhs = jnp.concatenate(
            [x_ref[dy:dy + tm, dx:dx + wo, :] for dx in range(3)], axis=-1)
        lhs = lhs.reshape(tm * wo, 3 * c4p)
        p = jnp.dot(lhs, w_ref[dy], preferred_element_type=jnp.float32)
        if dy == 0:
            acc_ref[...] = p
        else:
            acc_ref[...] += p
    o_ref[...] = (acc_ref[...] + b_ref[...]).astype(o_ref.dtype)


def encoder_head_5x5(x_nchw, weight, bias, *, groups, stride=2, padding=2):
    """Grouped 5x5 conv, stride 2, padding 2 (mcquic conv5x5) via Pallas."""
    if stride != 2 or padding != 2:
        raise ValueError("kernel specializes mcquic conv5x5 (stride=2, padding=2)")
    N, C, H, W = x_nchw.shape
    K = 5
    Cg = C // groups
    Ho = (H + 2 * padding - K) // stride + 1
    Wo = (W + 2 * padding - K) // stride + 1

    C4 = 4 * C                                        # s2d channel count
    C4p = max(128, ((C4 + 127) // 128) * 128)         # lane-aligned (keeps in-kernel concat aligned)
    C12 = 3 * C4p                                     # contraction dim (dx folded in)
    Cpad = ((C + 127) // 128) * 128                   # lane-dense output channels
    Wo_pad = ((Wo + 7) // 8) * 8                      # sublane-aligned output width
    W2p = Wo_pad + 2

    # ---- tile sizes: TM output rows / step, TN output channels / step -----------
    TM = max(1, min(8, Ho))
    if N * pl.cdiv(Ho, TM) < 2 and TM > 1:            # keep >= 2 grid steps for 2-TC parts
        TM = max(1, TM // 2)
    if Cpad <= 512:
        TN = Cpad
    elif Cpad % 512 == 0:
        TN = 512
    elif Cpad % 256 == 0:
        TN = 256
    else:
        TN = 128

    try:
        vmem_cap = int(pltpu.get_tpu_info().vmem_capacity_bytes)
    except Exception:
        vmem_cap = 64 * 1024 * 1024                   # v7x per-core floor
    budget = (vmem_cap * 3) // 4                      # ~48 MiB on v7x, ~96 MiB on v5e/v6e

    def _vmem_est(tm, tn):
        inp = 2 * (tm + 2) * W2p * C4p * 2            # double-buffered input window
        wgt = 2 * 3 * C12 * tn * 2                    # double-buffered weight slice
        outb = 2 * tm * Wo_pad * tn * 2               # double-buffered bf16 output block
        acc = tm * Wo_pad * tn * 4                    # f32 accumulator scratch
        lhs = 2 * tm * Wo_pad * C12 * 2               # folded-K LHS temporaries
        return int(1.25 * (inp + wgt + outb + acc + lhs)) + (2 << 20)

    while _vmem_est(TM, TN) > budget:
        nxt = TN // 2
        if TN > 128 and nxt % 128 == 0 and Cpad % nxt == 0:
            TN = nxt
        elif TN > 128:
            TN = 128
        elif TM > 1:
            TM = max(1, TM // 2)
        else:
            break

    RB = pl.cdiv(Ho, TM)
    Ho_pad = RB * TM
    CN = Cpad // TN

    # ---- glue: NHWC, zero-pad, space-to-depth, overlapping row windows ----------
    x = jnp.transpose(x_nchw, (0, 2, 3, 1)).astype(jnp.bfloat16)        # NHWC bf16
    Hp, Wp = H + 2 * padding, W + 2 * padding
    Hp2, Wp2 = Hp + (Hp % 2), Wp + (Wp % 2)                             # even for 2x2 s2d
    xp = jnp.pad(x, ((0, 0),
                     (padding, Hp2 - H - padding),
                     (padding, Wp2 - W - padding),
                     (0, 0)))
    H2, W2 = Hp2 // 2, Wp2 // 2                                         # == Ho+2, Wo+2
    xs = xp.reshape(N, H2, 2, W2, 2, C)
    xs = jnp.transpose(xs, (0, 1, 3, 2, 4, 5)).reshape(N, H2, W2, C4)   # c4 = sy*2C + sx*C + c
    xs = jnp.pad(xs, ((0, 0),
                      (0, Ho_pad + 2 - H2),                             # rows for padded row-blocks
                      (0, W2p - W2),                                    # cols for Wo_pad
                      (0, C4p - C4)))                                   # lane alignment
    win = jnp.arange(RB)[:, None] * TM + jnp.arange(TM + 2)[None, :]    # (RB, TM+2) overlapping windows
    xs_win = xs[:, win]                                                 # (N, RB, TM+2, W2p, C4p)

    # ---- weights: grouped OIHW 5x5 -> 3 taps of (3*C4p, Cpad) -------------------
    wg = weight.astype(jnp.float32).reshape(groups, Cg, Cg, K, K)       # (g, o, i, kh, kw)
    eye = jnp.eye(groups, dtype=jnp.float32)
    wfull = jnp.einsum('goihw,gk->hwkigo', wg, eye).reshape(K, K, C, C) # (kh,kw,Cin,Cout), block-diag
    wpad = jnp.pad(wfull, ((0, 1), (0, 1), (0, 0), (0, Cpad - C)))      # phantom 6th row/col, lane pad
    w9 = wpad.reshape(3, 2, 3, 2, C, Cpad).transpose(0, 2, 1, 3, 4, 5)  # (dy,dx,sy,sx,C,Cpad)
    w9 = w9.reshape(3, 3, C4, Cpad)
    w12 = jnp.zeros((3, 3, C4p, Cpad), jnp.float32).at[:, :, :C4, :].set(w9)
    w12 = w12.reshape(3, C12, Cpad).astype(jnp.bfloat16)
    b2 = jnp.pad(bias.astype(jnp.float32), (0, Cpad - C)).reshape(1, Cpad)

    # ---- Pallas: grid = (channel tiles [outermost -> weight slice resident], N, row blocks)
    flops = 2 * N * RB * TM * Wo_pad * C12 * Cpad
    bytes_accessed = (CN * N * RB * (TM + 2) * W2p * C4p * 2            # input windows (re-read per channel tile)
                      + 3 * C12 * Cpad * 2 + Cpad * 4                   # weights + bias
                      + N * RB * TM * Wo_pad * Cpad * 2)                # bf16 output
    vmem_limit = int(min(budget, max(32 << 20, 2 * _vmem_est(TM, TN))))

    out = pl.pallas_call(
        _conv5x5s2_kernel,
        out_shape=jax.ShapeDtypeStruct((N, RB, TM * Wo_pad, Cpad), jnp.bfloat16),
        grid_spec=pltpu.PrefetchScalarGridSpec(
            num_scalar_prefetch=0,
            grid=(CN, N, RB),
            in_specs=[
                pl.BlockSpec((None, None, TM + 2, W2p, C4p),
                             lambda cn, n, rb: (n, rb, 0, 0, 0)),
                pl.BlockSpec((3, C12, TN), lambda cn, n, rb: (0, 0, cn)),
                pl.BlockSpec((1, TN), lambda cn, n, rb: (0, cn)),
            ],
            out_specs=pl.BlockSpec((None, None, TM * Wo_pad, TN),
                                   lambda cn, n, rb: (n, rb, 0, cn)),
            scratch_shapes=[pltpu.VMEM((TM * Wo_pad, TN), jnp.float32)],
        ),
        compiler_params=pltpu.CompilerParams(
            dimension_semantics=("parallel", "parallel", "parallel"),
            vmem_limit_bytes=vmem_limit),
        cost_estimate=pl.CostEstimate(flops=flops, transcendentals=0,
                                      bytes_accessed=bytes_accessed),
    )(xs_win, w12, b2)
    # TODO(synk): single-buffering the constant-index w12/b2 specs (pl.Buffered(1)) and
    # fusing the pad+s2d into the kernel would shave the remaining VMEM/HBM overhead
    # where supported; kept on the plain blocked path for robustness.

    out = out.reshape(N, Ho_pad, Wo_pad, Cpad)[:, :Ho, :Wo, :C]          # drop row/col/lane padding
    return jnp.transpose(out, (0, 3, 1, 2)).astype(x_nchw.dtype)         # back to NCHW


def _reference(x, weight, bias, groups):
    return jax.lax.conv_general_dilated(
        x, weight, window_strides=(2, 2), padding=((2, 2), (2, 2)),
        dimension_numbers=("NCHW", "OIHW", "NCHW"),
        feature_group_count=groups) + bias.reshape(1, -1, 1, 1)


def _check(key, N, C, H, W, groups):
    k_x, k_w, k_b = jax.random.split(key, 3)
    x = jax.random.normal(k_x, (N, C, H, W), jnp.float32)
    # Parameter shapes of nn.Conv2d(C, C, 5, stride=2, padding=2, groups=groups).
    weight = jax.random.normal(k_w, (C, C // groups, 5, 5), jnp.float32) * 0.1
    bias = jax.random.normal(k_b, (C,), jnp.float32) * 0.1

    fwd = jax.jit(functools.partial(encoder_head_5x5, groups=groups))
    y = jax.block_until_ready(fwd(x, weight, bias))
    ref = _reference(x, weight, bias, groups)

    Ho, Wo = (H + 4 - 5) // 2 + 1, (W + 4 - 5) // 2 + 1
    assert y.shape == (N, C, Ho, Wo), (y.shape, (N, C, Ho, Wo))
    # bf16 MXU inputs + bf16 output store with f32 accumulation -> bf16-level tolerance.
    err = float(jnp.max(jnp.abs(y - ref)))
    assert jnp.allclose(y, ref, atol=5e-2, rtol=5e-2), err


if __name__ == "__main__":
    key = jax.random.PRNGKey(0)
    k1, k2 = jax.random.split(key)
    # Tiny config from the module example (exercises the small-C lane-padding path).
    _check(k1, N=2, C=4, H=16, W=16, groups=2)
    # Larger config exercising multi-row-block windows + row/col output padding.
    _check(k2, N=1, C=32, H=28, W=28, groups=4)
    print("KERNEL_OK")
</pallas_src>

<mosaic_0001>
module attributes {stable_mosaic.version = 11 : i64} {
  func.func @_conv5x5s2_kernel(%arg0: i32, %arg1: i32, %arg2: i32, %arg3: memref<1x1x10x10x128xbf16, #tpu.memory_space<vmem>>, %arg4: memref<3x384x128xbf16, #tpu.memory_space<vmem>>, %arg5: memref<1x128xf32, #tpu.memory_space<vmem>>, %arg6: memref<1x1x64x128xbf16, #tpu.memory_space<vmem>>, %arg7: memref<64x128xf32, #tpu.memory_space<vmem>>) attributes {dimension_semantics = [#tpu.dimension_semantics<parallel>, #tpu.dimension_semantics<parallel>, #tpu.dimension_semantics<parallel>], iteration_bounds = array<i64: 1, 2, 1>, scalar_prefetch = 0 : i64, scratch_operands = 1 : i64, tpu.core_type = #tpu.core_type<tc>, window_params = [{transform_indices = @transform_0, window_bounds = array<i64: 1, 1, 10, 10, 128>}, {transform_indices = @transform_1, window_bounds = array<i64: 3, 384, 128>}, {transform_indices = @transform_2, window_bounds = array<i64: 1, 128>}, {transform_indices = @transform_3, window_bounds = array<i64: 1, 1, 64, 128>}]} {
    %c0 = arith.constant 0 : index
    %c0_0 = arith.constant 0 : index
    %c0_1 = arith.constant 0 : index
    %c0_2 = arith.constant 0 : index
    %c0_3 = arith.constant 0 : index
    %0 = vector.load %arg3[%c0, %c0_0, %c0_1, %c0_2, %c0_3] : memref<1x1x10x10x128xbf16, #tpu.memory_space<vmem>>, vector<1x1x8x8x128xbf16>
    %1 = vector.shape_cast %0 : vector<1x1x8x8x128xbf16> to vector<8x8x128xbf16>
    %c0_4 = arith.constant 0 : index
    %c0_5 = arith.constant 0 : index
    %c0_6 = arith.constant 0 : index
    %c1 = arith.constant 1 : index
    %c0_7 = arith.constant 0 : index
    %2 = vector.load %arg3[%c0_4, %c0_5, %c0_6, %c1, %c0_7] : memref<1x1x10x10x128xbf16, #tpu.memory_space<vmem>>, vector<1x1x8x8x128xbf16>
    %3 = vector.shape_cast %2 : vector<1x1x8x8x128xbf16> to vector<8x8x128xbf16>
    %c0_8 = arith.constant 0 : index
    %c0_9 = arith.constant 0 : index
    %c0_10 = arith.constant 0 : index
    %c2 = arith.constant 2 : index
    %c0_11 = arith.constant 0 : index
    %4 = vector.load %arg3[%c0_8, %c0_9, %c0_10, %c2, %c0_11] : memref<1x1x10x10x128xbf16, #tpu.memory_space<vmem>>, vector<1x1x8x8x128xbf16>
    %5 = vector.shape_cast %4 : vector<1x1x8x8x128xbf16> to vector<8x8x128xbf16>
    %6 = tpu.concatenate %1, %3, %5 in 2 : vector<8x8x128xbf16>, vector<8x8x128xbf16>, vector<8x8x128xbf16> -> vector<8x8x384xbf16>
    %7 = vector.shape_cast %6 : vector<8x8x384xbf16> to vector<64x384xbf16>
    %c0_12 = arith.constant 0 : index
    %c0_13 = arith.constant 0 : index
    %c0_14 = arith.constant 0 : index
    %8 = vector.load %arg4[%c0_12, %c0_13, %c0_14] : memref<3x384x128xbf16, #tpu.memory_space<vmem>>, vector<1x384x128xbf16>
    %9 = vector.shape_cast %8 : vector<1x384x128xbf16> to vector<384x128xbf16>
    %cst = arith.constant dense<0.000000e+00> : vector<64x128xf32>
    %10 = tpu.matmul %7, %9, %cst {dimension_numbers = #tpu.dot_dimension_numbers<[1], [0], [0], [1], [0, 0, 1, 1], [], []>} : vector<64x384xbf16>, vector<384x128xbf16>, vector<64x128xf32> -> vector<64x128xf32>
    %c0_15 = arith.constant 0 : index
    %c0_16 = arith.constant 0 : index
    %11 = vector.load %arg7[%c0_15, %c0_16] : memref<64x128xf32, #tpu.memory_space<vmem>>, vector<64x128xf32>
    tpu.vector_store %arg7[%c0_15, %c0_16], %10 {strides = array<i32>} : memref<64x128xf32, #tpu.memory_space<vmem>>, vector<64x128xf32>,
    %c0_17 = arith.constant 0 : index
    %c0_18 = arith.constant 0 : index
    %c1_19 = arith.constant 1 : index
    %c0_20 = arith.constant 0 : index
    %c0_21 = arith.constant 0 : index
    %12 = vector.load %arg3[%c0_17, %c0_18, %c1_19, %c0_20, %c0_21] : memref<1x1x10x10x128xbf16, #tpu.memory_space<vmem>>, vector<1x1x8x8x128xbf16>
    %13 = vector.shape_cast %12 : vector<1x1x8x8x128xbf16> to vector<8x8x128xbf16>
    %c0_22 = arith.constant 0 : index
    %c0_23 = arith.constant 0 : index
    %c1_24 = arith.constant 1 : index
    %c1_25 = arith.constant 1 : index
    %c0_26 = arith.constant 0 : index
    %14 = vector.load %arg3[%c0_22, %c0_23, %c1_24, %c1_25, %c0_26] : memref<1x1x10x10x128xbf16, #tpu.memory_space<vmem>>, vector<1x1x8x8x128xbf16>
    %15 = vector.shape_cast %14 : vector<1x1x8x8x128xbf16> to vector<8x8x128xbf16>
    %c0_27 = arith.constant 0 : index
    %c0_28 = arith.constant 0 : index
    %c1_29 = arith.constant 1 : index
    %c2_30 = arith.constant 2 : index
    %c0_31 = arith.constant 0 : index
    %16 = vector.load %arg3[%c0_27, %c0_28, %c1_29, %c2_30, %c0_31] : memref<1x1x10x10x128xbf16, #tpu.memory_space<vmem>>, vector<1x1x8x8x128xbf16>
    %17 = vector.shape_cast %16 : vector<1x1x8x8x128xbf16> to vector<8x8x128xbf16>
    %18 = tpu.concatenate %13, %15, %17 in 2 : vector<8x8x128xbf16>, vector<8x8x128xbf16>, vector<8x8x128xbf16> -> vector<8x8x384xbf16>
    %19 = vector.shape_cast %18 : vector<8x8x384xbf16> to vector<64x384xbf16>
    %c1_32 = arith.constant 1 : index
    %c0_33 = arith.constant 0 : index
    %c0_34 = arith.constant 0 : index
    %20 = vector.load %arg4[%c1_32, %c0_33, %c0_34] : memref<3x384x128xbf16, #tpu.memory_space<vmem>>, vector<1x384x128xbf16>
    %21 = vector.shape_cast %20 : vector<1x384x128xbf16> to vector<384x128xbf16>
    %cst_35 = arith.constant dense<0.000000e+00> : vector<64x128xf32>
    %22 = tpu.matmul %19, %21, %cst_35 {dimension_numbers = #tpu.dot_dimension_numbers<[1], [0], [0], [1], [0, 0, 1, 1], [], []>} : vector<64x384xbf16>, vector<384x128xbf16>, vector<64x128xf32> -> vector<64x128xf32>
    %c0_36 = arith.constant 0 : index
    %c0_37 = arith.constant 0 : index
    %23 = vector.load %arg7[%c0_36, %c0_37] : memref<64x128xf32, #tpu.memory_space<vmem>>, vector<64x128xf32>
    %24 = arith.addf %23, %22 : vector<64x128xf32>
    %c0_38 = arith.constant 0 : index
    %c0_39 = arith.constant 0 : index
    %25 = vector.load %arg7[%c0_38, %c0_39] : memref<64x128xf32, #tpu.memory_space<vmem>>, vector<64x128xf32>
    tpu.vector_store %arg7[%c0_38, %c0_39], %24 {strides = array<i32>} : memref<64x128xf32, #tpu.memory_space<vmem>>, vector<64x128xf32>,
    %c0_40 = arith.constant 0 : index
    %c0_41 = arith.constant 0 : index
    %c2_42 = arith.constant 2 : index
    %c0_43 = arith.constant 0 : index
    %c0_44 = arith.constant 0 : index
    %26 = vector.load %arg3[%c0_40, %c0_41, %c2_42, %c0_43, %c0_44] : memref<1x1x10x10x128xbf16, #tpu.memory_space<vmem>>, vector<1x1x8x8x128xbf16>
    %27 = vector.shape_cast %26 : vector<1x1x8x8x128xbf16> to vector<8x8x128xbf16>
    %c0_45 = arith.constant 0 : index
    %c0_46 = arith.constant 0 : index
    %c2_47 = arith.constant 2 : index
    %c1_48 = arith.constant 1 : index
    %c0_49 = arith.constant 0 : index
    %28 = vector.load %arg3[%c0_45, %c0_46, %c2_47, %c1_48, %c0_49] : memref<1x1x10x10x128xbf16, #tpu.memory_space<vmem>>, vector<1x1x8x8x128xbf16>
    %29 = vector.shape_cast %28 : vector<1x1x8x8x128xbf16> to vector<8x8x128xbf16>
    %c0_50 = arith.constant 0 : index
    %c0_51 = arith.constant 0 : index
    %c2_52 = arith.constant 2 : index
    %c2_53 = arith.constant 2 : index
    %c0_54 = arith.constant 0 : index
    %30 = vector.load %arg3[%c0_50, %c0_51, %c2_52, %c2_53, %c0_54] : memref<1x1x10x10x128xbf16, #tpu.memory_space<vmem>>, vector<1x1x8x8x128xbf16>
    %31 = vector.shape_cast %30 : vector<1x1x8x8x128xbf16> to vector<8x8x128xbf16>
    %32 = tpu.concatenate %27, %29, %31 in 2 : vector<8x8x128xbf16>, vector<8x8x128xbf16>, vector<8x8x128xbf16> -> vector<8x8x384xbf16>
    %33 = vector.shape_cast %32 : vector<8x8x384xbf16> to vector<64x384xbf16>
    %c2_55 = arith.constant 2 : index
    %c0_56 = arith.constant 0 : index
    %c0_57 = arith.constant 0 : index
    %34 = vector.load %arg4[%c2_55, %c0_56, %c0_57] : memref<3x384x128xbf16, #tpu.memory_space<vmem>>, vector<1x384x128xbf16>
    %35 = vector.shape_cast %34 : vector<1x384x128xbf16> to vector<384x128xbf16>
    %cst_58 = arith.constant dense<0.000000e+00> : vector<64x128xf32>
    %36 = tpu.matmul %33, %35, %cst_58 {dimension_numbers = #tpu.dot_dimension_numbers<[1], [0], [0], [1], [0, 0, 1, 1], [], []>} : vector<64x384xbf16>, vector<384x128xbf16>, vector<64x128xf32> -> vector<64x128xf32>
    %c0_59 = arith.constant 0 : index
    %c0_60 = arith.constant 0 : index
    %37 = vector.load %arg7[%c0_59, %c0_60] : memref<64x128xf32, #tpu.memory_space<vmem>>, vector<64x128xf32>
    %38 = arith.addf %37, %36 : vector<64x128xf32>
    %c0_61 = arith.constant 0 : index
    %c0_62 = arith.constant 0 : index
    %39 = vector.load %arg7[%c0_61, %c0_62] : memref<64x128xf32, #tpu.memory_space<vmem>>, vector<64x128xf32>
    tpu.vector_store %arg7[%c0_61, %c0_62], %38 {strides = array<i32>} : memref<64x128xf32, #tpu.memory_space<vmem>>, vector<64x128xf32>,
    %c0_63 = arith.constant 0 : index
    %c0_64 = arith.constant 0 : index
    %40 = vector.load %arg7[%c0_63, %c0_64] : memref<64x128xf32, #tpu.memory_space<vmem>>, vector<64x128xf32>
    %c0_65 = arith.constant 0 : index
    %c0_66 = arith.constant 0 : index
    %41 = vector.load %arg5[%c0_65, %c0_66] : memref<1x128xf32, #tpu.memory_space<vmem>>, vector<1x128xf32>
    %42 = vector.broadcast %41 : vector<1x128xf32> to vector<64x128xf32>
    %43 = arith.addf %40, %42 : vector<64x128xf32>
    %44 = arith.truncf %43 : vector<64x128xf32> to vector<64x128xbf16>
    %c0_67 = arith.constant 0 : index
    %c0_68 = arith.constant 0 : index
    %c0_69 = arith.constant 0 : index
    %c0_70 = arith.constant 0 : index
    %45 = vector.load %arg6[%c0_67, %c0_68, %c0_69, %c0_70] : memref<1x1x64x128xbf16, #tpu.memory_space<vmem>>, vector<1x1x64x128xbf16>
    %46 = vector.shape_cast %45 : vector<1x1x64x128xbf16> to vector<64x128xbf16>
    %47 = vector.shape_cast %44 : vector<64x128xbf16> to vector<1x1x64x128xbf16>
    tpu.vector_store %arg6[%c0_67, %c0_68, %c0_69, %c0_70], %47 {strides = array<i32>} : memref<1x1x64x128xbf16, #tpu.memory_space<vmem>>, vector<1x1x64x128xbf16>,
    return
  }
  func.func @transform_0(%arg0: i32, %arg1: i32, %arg2: i32) -> (i32, i32, i32, i32, i32) {
    %c0_i32 = arith.constant 0 : i32
    %c0_i32_0 = arith.constant 0 : i32
    %c0_i32_1 = arith.constant 0 : i32
    %c0_i32_2 = arith.constant 0 : i32
    return %arg1, %arg2, %c0_i32, %c0_i32_0, %c0_i32_1 : i32, i32, i32, i32, i32
  }
  func.func @transform_1(%arg0: i32, %arg1: i32, %arg2: i32) -> (i32, i32, i32) {
    %c0_i32 = arith.constant 0 : i32
    %c0_i32_0 = arith.constant 0 : i32
    %c0_i32_1 = arith.constant 0 : i32
    return %c0_i32, %c0_i32_0, %arg0 : i32, i32, i32
  }
  func.func @transform_2(%arg0: i32, %arg1: i32, %arg2: i32) -> (i32, i32) {
    %c0_i32 = arith.constant 0 : i32
    %c0_i32_0 = arith.constant 0 : i32
    return %c0_i32, %arg0 : i32, i32
  }
  func.func @transform_3(%arg0: i32, %arg1: i32, %arg2: i32) -> (i32, i32, i32, i32) {
    %c0_i32 = arith.constant 0 : i32
    %c0_i32_0 = arith.constant 0 : i32
    return %arg1, %arg2, %c0_i32, %arg0 : i32, i32, i32, i32
  }
}

</mosaic_0001>

<llo_original>
// kernel: encoder_head_5x5.1
$region0: #{encoder_head_5x5.1}
  #allocation0 [shape = 'u32[]', space=smem, size = 0x4, offset = 0x4, fixed_abs, tag = 'smem constant byte address 0x4 - core index']
  #allocation1 [shape = 'u32[144,128]{1,0:T(1,128)}', space=vmem, size = 0x12000, scoped, tag = 'internal scratch']
  #allocation2 [shape = 'f32[64,128]{1,0:T(8,128)}', space=vmem, size = 0x8000, scoped, tag = 'scratch operand']
  %s0 = inlined_call_operand.vmem [shape: bf16[2,1,10,10,128], index: 0, kind: input, shape index: {}]
  %s1 = inlined_call_operand.vmem [shape: bf16[3,384,128], index: 1, kind: input, shape index: {}]
  %s2 = inlined_call_operand.vmem [shape: f32[1,128], index: 2, kind: input, shape index: {}]
  %s3 = inlined_call_operand.vmem [shape: bf16[2,1,64,128], index: 3, kind: output, shape index: {}]
  %s4 = sld [smem:[#allocation0]]
  $region45: #{encoder_head_5x5.1} parent=0
    _
  %s6 = ssub.s32 1, %s4
  %s7 = scalar_select 0, %s6, %s4
  loop: start=0, step=1, limit=4
  $region2: #{encoder_head_5x5.1} parent=0 // loop_pre_header
    _
  $region3: #{encoder_head_5x5.1} parent=0 // loop_header
    %s9 = sphi 0, %s13
    %p10 = scmp.ge.s32.totalorder %s9, 4
    %s16 = sphi 0, %s35
    %s17 = sphi 0, %s31
    %s18 = sphi 0, %s27
    %s19 = sphi 0, %s16
    %s20 = sphi 0, %s17
    %s21 = sphi 0, %s18
    %s22 = sphi 0, %s19
    %s23 = sphi 0, %s20
    %s24 = sphi 0, %s21
    %s40 = sphi 0, %s42
    %s43 = sphi 0, %s40
    %s44 = sphi 0, %s43
    %s60 = sphi 0, %s44
    %s66 = sphi 0, %s68
    %s69 = sphi 0, %s66
    %s70 = sphi 0, %s69
    %s86 = sphi 0, %s70
    %s92 = sphi 0, %s94
    %s95 = sphi 0, %s92
    %s96 = sphi 0, %s95
    %s112 = sphi 0, %s96
    %s122 = sphi 0, %s124
    %s125 = sphi 0, %s122
    %s126 = sphi 0, %s125
    %s142 = sphi 0, %s126
  $region4: #{encoder_head_5x5.1} parent=0 // loop_header_branch
    %12 = sbr.rel (%p10) target = $region8
  $region5: #{encoder_head_5x5.1} parent=0 // loop_body
    %s14 = ssub.s32 %s9, 1
    %s15 = ssub.s32 %s9, 2
    %s25 = sadd.s32 1, %s18
    %p26 = scmp.ge.s32.totalorder %s25, 1
    %s27 = scalar_select %p26, 0, %s25
    %s28 = sadd.s32 1, %s17
    %s29 = scalar_select %p26, %s28, %s17
    %p30 = scmp.ge.s32.totalorder %s29, 2
    %s31 = scalar_select %p30, 0, %s29
    %s32 = sadd.s32 1, %s16
    %s33 = scalar_select %p30, %s32, %s16
    %p34 = scmp.ge.s32.totalorder %s33, 1
    %s35 = scalar_select %p34, 0, %s33
    %s36 = ssub.s32 %s17, %s31
    %s37 = ssub.s32 %s18, %s27
    %s38 = sor.u32 %s36, %s37
    %p39 = scmp.eq.s32.totalorder %s38, 0
    %s41 = sadd.s32 %s40, 1
    %s42 = scalar_select %p39, %s40, %s41
    %p45 = pneg %p39
    %p46 = scmp.eq.s32.totalorder %s9, 1
    %p47 = por %p45, %p46
    %p48 = scmp.ne.s32.totalorder %s40, %s43
    %p49 = scmp.eq.s32.totalorder %s9, 0
    %p50 = por %p48, %p49
    %p51 = scmp.ne.s32.totalorder %s40, %s43
    %p52 = scmp.eq.s32.totalorder %s14, 1
    %p53 = por %p51, %p52
    %p54 = scmp.ne.s32.totalorder %s43, %s44
    %p55 = scmp.eq.s32.totalorder %s14, 0
    %p56 = por %p54, %p55
    %p57 = scmp.ne.s32.totalorder %s43, %s44
    %p58 = scmp.eq.s32.totalorder %s15, 1
    %p59 = por %p57, %p58
    %p61 = scmp.ne.s32.totalorder %s44, %s60
    %p62 = scmp.eq.s32.totalorder %s15, 0
    %p63 = por %p61, %p62
    %s64 = ssub.s32 %s16, %s35
    %p65 = scmp.eq.s32.totalorder %s64, 0
    %s67 = sadd.s32 %s66, 1
    %s68 = scalar_select %p65, %s66, %s67
    %p71 = pneg %p65
    %p72 = scmp.eq.s32.totalorder %s9, 1
    %p73 = por %p71, %p72
    %p74 = scmp.ne.s32.totalorder %s66, %s69
    %p75 = scmp.eq.s32.totalorder %s9, 0
    %p76 = por %p74, %p75
    %p77 = scmp.ne.s32.totalorder %s66, %s69
    %p78 = scmp.eq.s32.totalorder %s14, 1
    %p79 = por %p77, %p78
    %p80 = scmp.ne.s32.totalorder %s69, %s70
    %p81 = scmp.eq.s32.totalorder %s14, 0
    %p82 = por %p80, %p81
    %p83 = scmp.ne.s32.totalorder %s69, %s70
    %p84 = scmp.eq.s32.totalorder %s15, 1
    %p85 = por %p83, %p84
    %p87 = scmp.ne.s32.totalorder %s70, %s86
    %p88 = scmp.eq.s32.totalorder %s15, 0
    %p89 = por %p87, %p88
    %s90 = ssub.s32 %s16, %s35
    %p91 = scmp.eq.s32.totalorder %s90, 0
    %s93 = sadd.s32 %s92, 1
    %s94 = scalar_select %p91, %s92, %s93
    %p97 = pneg %p91
    %p98 = scmp.eq.s32.totalorder %s9, 1
    %p99 = por %p97, %p98
    %p100 = scmp.ne.s32.totalorder %s92, %s95
    %p101 = scmp.eq.s32.totalorder %s9, 0
    %p102 = por %p100, %p101
    %p103 = scmp.ne.s32.totalorder %s92, %s95
    %p104 = scmp.eq.s32.totalorder %s14, 1
    %p105 = por %p103, %p104
    %p106 = scmp.ne.s32.totalorder %s95, %s96
    %p107 = scmp.eq.s32.totalorder %s14, 0
    %p108 = por %p106, %p107
    %p109 = scmp.ne.s32.totalorder %s95, %s96
    %p110 = scmp.eq.s32.totalorder %s15, 1
    %p111 = por %p109, %p110
    %p113 = scmp.ne.s32.totalorder %s96, %s112
    %p114 = scmp.eq.s32.totalorder %s15, 0
    %p115 = por %p113, %p114
    %s116 = ssub.s32 %s17, %s31
    %s117 = ssub.s32 %s18, %s27
    %s118 = sor.u32 %s116, %s117
    %s119 = ssub.s32 %s16, %s35
    %s120 = sor.u32 %s118, %s119
    %p121 = scmp.eq.s32.totalorder %s120, 0
    %s123 = sadd.s32 %s122, 1
    %s124 = scalar_select %p121, %s122, %s123
    %p127 = pneg %p121
    %p128 = scmp.eq.s32.totalorder %s9, 1
    %p129 = por %p127, %p128
    %p130 = scmp.ne.s32.totalorder %s122, %s125
    %p131 = scmp.eq.s32.totalorder %s9, 0
    %p132 = por %p130, %p131
    %p133 = scmp.ne.s32.totalorder %s122, %s125
    %p134 = scmp.eq.s32.totalorder %s14, 1
    %p135 = por %p133, %p134
    %p136 = scmp.ne.s32.totalorder %s125, %s126
    %p137 = scmp.eq.s32.totalorder %s14, 0
    %p138 = por %p136, %p137
    %p139 = scmp.ne.s32.totalorder %s125, %s126
    %p140 = scmp.eq.s32.totalorder %s15, 1
    %p141 = por %p139, %p140
    %p143 = scmp.ne.s32.totalorder %s126, %s142
    %p144 = scmp.eq.s32.totalorder %s15, 0
    %p145 = por %p143, %p144
    %p146 = scmp.le.s32.totalorder 1, %s9
    %p147 = scmp.lt.s32.totalorder %s9, 3
    %p148 = pnand %p146, %p147
    %p149 = pneg %p148
    // Predicated region
    $region9: #{encoder_head_5x5.1} parent=5 // pred_check
      _
    $region10: #{encoder_head_5x5.1} parent=5 // pred_check_branch
      %151 = sbr.rel (%p148) target = $region12
    $region11: #{encoder_head_5x5.1} parent=5 // pred_region
      %s152 = ssub.s32 %s9, 1
      // Predicated region
      $region13: #{encoder_head_5x5.1} parent=11 // pred_check
        %p153 = pneg %p82
      $region14: #{encoder_head_5x5.1} parent=11 // pred_check_branch
        %155 = sbr.rel (%p153) target = $region16
      $region15: #{encoder_head_5x5.1} parent=11 // pred_region
        %p156 = scmp.lt.s32.totalorder %s19, 0
        %s157 = scalar_select %p156, %s19, 0
        %s158 = smul.addr %s157, 4
        %s159 = scalar_lea.vmem %s1, %s158
      $region16: #{encoder_head_5x5.1} parent=11 // pred_fallthru
        _
      // Predicated region
      $region17: #{encoder_head_5x5.1} parent=11 // pred_check
        %p160 = pneg %p108
      $region18: #{encoder_head_5x5.1} parent=11 // pred_check_branch
        %162 = sbr.rel (%p160) target = $region20
      $region19: #{encoder_head_5x5.1} parent=11 // pred_region
        %p163 = scmp.lt.s32.totalorder %s19, 0
        %s164 = scalar_select %p163, %s19, 0
        %s165 = scalar_lea.vmem %s2, %s164
      $region20: #{encoder_head_5x5.1} parent=11 // pred_fallthru
        _
    $region12: #{encoder_head_5x5.1} parent=5 // pred_fallthru
      _
    %p166 = scmp.lt.s32.totalorder %s9, 2
    // Predicated region
    $region21: #{encoder_head_5x5.1} parent=5 // pred_check
      %p167 = pneg %p166
    $region22: #{encoder_head_5x5.1} parent=5 // pred_check_branch
      %169 = sbr.rel (%p167) target = $region24
    $region23: #{encoder_head_5x5.1} parent=5 // pred_region
      // Predicated region
      $region25: #{encoder_head_5x5.1} parent=23 // pred_check
        %p170 = pneg %p50
      $region26: #{encoder_head_5x5.1} parent=23 // pred_check_branch
        %172 = sbr.rel (%p170) target = $region28
      $region27: #{encoder_head_5x5.1} parent=23 // pred_region
        %p173 = scmp.lt.s32.totalorder %s17, 1
        %s174 = scalar_select %p173, %s17, 1
        %p175 = scmp.lt.s32.totalorder %s18, 0
        %s176 = scalar_select %p175, %s18, 0
        %s177 = smul.addr %s176, 20
        %s178 = smul.addr %s174, 20
        %s179 = sadd.s32 %s177, %s178
        %s180 = smul.addr %s179, 4
        %s181 = scalar_lea.vmem %s0, %s180
      $region28: #{encoder_head_5x5.1} parent=23 // pred_fallthru
        _
    $region24: #{encoder_head_5x5.1} parent=5 // pred_fallthru
      _
    %p182 = scmp.le.s32.totalorder 1, %s9
    %p183 = scmp.lt.s32.totalorder %s9, 3
    %p184 = pnand %p182, %p183
    %p185 = pneg %p184
    // Predicated region
    $region29: #{encoder_head_5x5.1} parent=5 // pred_check
      _
    $region30: #{encoder_head_5x5.1} parent=5 // pred_check_branch
      %187 = sbr.rel (%p184) target = $region32
    $region31: #{encoder_head_5x5.1} parent=5 // pred_region
      %s188 = ssub.s32 %s9, 1
      %p189 = scmp.lt.s32.totalorder %s20, 1
      %s190 = scalar_select %p189, %s20, 1
      %p191 = scmp.lt.s32.totalorder %s21, 0
      %s192 = scalar_select %p191, %s21, 0
      %s193 = smul.addr %s192, 20
      %s194 = smul.addr %s190, 20
      %s195 = sadd.s32 %s193, %s194
      %s196 = smul.addr %s195, 4
      %s197 = scalar_lea.vmem %s0, %s196
      %p198 = pneg %p56
      %p199 = pneg %p53
      %p200 = scmp.lt.s32.totalorder %s19, 0
      %s201 = scalar_select %p200, %s19, 0
      %s202 = smul.addr %s201, 4
      %s203 = scalar_lea.vmem %s1, %s202
      %p204 = pneg %p82
      %p205 = pneg %p79
      %p206 = scmp.lt.s32.totalorder %s19, 0
      %s207 = scalar_select %p206, %s19, 0
      %s208 = scalar_lea.vmem %s2, %s207
      %p209 = pneg %p108
      %p210 = pneg %p105
      %p211 = pneg %p138
      %p212 = pneg %p135
      %p213 = scmp.lt.s32.totalorder %s20, 1
      %s214 = scalar_select %p213, %s20, 1
      %p215 = scmp.lt.s32.totalorder %s21, 0
      %s216 = scalar_select %p215, %s21, 0
      %p217 = scmp.lt.s32.totalorder %s19, 0
      %s218 = scalar_select %p217, %s19, 0
      %s219 = smul.addr %s216, 8
      %s220 = sadd.s32 %s218, %s219
      %s221 = smul.addr %s214, 8
      %s222 = sadd.s32 %s220, %s221
      %s223 = smul.addr %s222, 4
      %s224 = scalar_lea.vmem %s3, %s223
      %p225 = scmp.lt.s32.totalorder %s20, 1
      %s226 = scalar_select %p225, %s20, 1
      %p227 = scmp.lt.s32.totalorder %s21, 0
      %s228 = scalar_select %p227, %s21, 0
      %s229 = smul.addr %s228, 20
      %s230 = smul.addr %s226, 20
      %s231 = sadd.s32 %s229, %s230
      %s232 = smul.addr %s231, 4
      %s233 = scalar_lea.vmem %s0, %s232
      %p234 = scmp.lt.s32.totalorder %s19, 0
      %s235 = scalar_select %p234, %s19, 0
      %s236 = smul.addr %s235, 4
      %s237 = scalar_lea.vmem %s1, %s236
      %p238 = scmp.lt.s32.totalorder %s19, 0
      %s239 = scalar_select %p238, %s19, 0
      %s240 = scalar_lea.vmem %s2, %s239
      %p241 = scmp.lt.s32.totalorder %s20, 1
      %s242 = scalar_select %p241, %s20, 1
      %p243 = scmp.lt.s32.totalorder %s21, 0
      %s244 = scalar_select %p243, %s21, 0
      %p245 = scmp.lt.s32.totalorder %s19, 0
      %s246 = scalar_select %p245, %s19, 0
      %s247 = smul.addr %s244, 8
      %s248 = sadd.s32 %s246, %s247
      %s249 = smul.addr %s242, 8
      %s250 = sadd.s32 %s248, %s249
      %s251 = smul.addr %s250, 4
      %s252 = scalar_lea.vmem %s3, %s251
      %v254 = vld [vmem:[%s233] sm:$0xf]
      %v255 = vld [vmem:[%s233 + $0x8] sm:$0xf]
      %v256 = vld [vmem:[%s233 + $0x10] sm:$0xf]
      %v257 = vld [vmem:[%s233 + $0x18] sm:$0xf]
      %v258 = vld [vmem:[%s233 + $0x20] sm:$0xf]
      %v259 = vld [vmem:[%s233 + $0x28] sm:$0xf]
      %v260 = vld [vmem:[%s233 + $0x30] sm:$0xf]
      %v261 = vld [vmem:[%s233 + $0x38] sm:$0xf]
      %v262 = vld [vmem:[%s233 + $0x4] sm:$0x1]
      %v263 = vld [vmem:[%s233 + $0xc] sm:$0x1]
      %v264 = vld [vmem:[%s233 + $0x14] sm:$0x1]
      %v265 = vld [vmem:[%s233 + $0x1c] sm:$0x1]
      %v266 = vld [vmem:[%s233 + $0x24] sm:$0x1]
      %v267 = vld [vmem:[%s233 + $0x2c] sm:$0x1]
      %v268 = vld [vmem:[%s233 + $0x34] sm:$0x1]
      %v269 = vld [vmem:[%s233 + $0x3c] sm:$0x1]
      %v270 = vld [vmem:[%s233] sm:$0xe]
      %v271 = vld [vmem:[%s233 + $0x8] sm:$0xe]
      %v272 = vld [vmem:[%s233 + $0x10] sm:$0xe]
      %v273 = vld [vmem:[%s233 + $0x18] sm:$0xe]
      %v274 = vld [vmem:[%s233 + $0x20] sm:$0xe]
      %v275 = vld [vmem:[%s233 + $0x28] sm:$0xe]
      %v276 = vld [vmem:[%s233 + $0x30] sm:$0xe]
      %v277 = vld [vmem:[%s233 + $0x38] sm:$0xe]
      %v294 = vunpack.c.l.b16 %v254
      %v295 = vunpack.c.l.b16 %v262
      %v296 = vunpack.c.l.b16 %v255
      %v297 = vunpack.c.l.b16 %v263
      %v298 = vunpack.c.l.b16 %v256
      %v299 = vunpack.c.l.b16 %v264
      %v300 = vunpack.c.l.b16 %v257
      %v301 = vunpack.c.l.b16 %v265
      %v302 = vunpack.c.l.b16 %v258
      %v303 = vunpack.c.l.b16 %v266
      %v304 = vunpack.c.l.b16 %v259
      %v305 = vunpack.c.l.b16 %v267
      %v306 = vunpack.c.l.b16 %v260
      %v307 = vunpack.c.l.b16 %v268
      %v308 = vunpack.c.l.b16 %v261
      %v309 = vunpack.c.l.b16 %v269
      %v310 = vpack.c.b16 %v295, %v294
      %v311 = vpack.c.b16 %v297, %v296
      %v312 = vpack.c.b16 %v299, %v298
      %v313 = vpack.c.b16 %v301, %v300
      %v314 = vpack.c.b16 %v303, %v302
      %v315 = vpack.c.b16 %v305, %v304
      %v316 = vpack.c.b16 %v307, %v306
      %v317 = vpack.c.b16 %v309, %v308
      %v319 = vshrl.u32 %v310, 16
      %v321 = vshll.u32 %v310, 16
      %v323 = vrot.slane %v321, 1
      %v324 = vor.u32 %v319, %v323
      %v326 = vshrl.u32 %v311, 16
      %v328 = vshll.u32 %v311, 16
      %v330 = vrot.slane %v328, 1
      %v331 = vor.u32 %v326, %v330
      %v333 = vshrl.u32 %v312, 16
      %v335 = vshll.u32 %v312, 16
      %v337 = vrot.slane %v335, 1
      %v338 = vor.u32 %v333, %v337
      %v340 = vshrl.u32 %v313, 16
      %v342 = vshll.u32 %v313, 16
      %v344 = vrot.slane %v342, 1
      %v345 = vor.u32 %v340, %v344
      %v347 = vshrl.u32 %v314, 16
      %v349 = vshll.u32 %v314, 16
      %v351 = vrot.slane %v349, 1
      %v352 = vor.u32 %v347, %v351
      %v354 = vshrl.u32 %v315, 16
      %v356 = vshll.u32 %v315, 16
      %v358 = vrot.slane %v356, 1
      %v359 = vor.u32 %v354, %v358
      %v361 = vshrl.u32 %v316, 16
      %v363 = vshll.u32 %v316, 16
      %v365 = vrot.slane %v363, 1
      %v366 = vor.u32 %v361, %v365
      %v368 = vshrl.u32 %v317, 16
      %v370 = vshll.u32 %v317, 16
      %v372 = vrot.slane %v370, 1
      %v373 = vor.u32 %v368, %v372
      %v382 = vunpack.c.l.b16 %v270
      %v383 = vunpack.c.l.b16 %v271
      %v384 = vunpack.c.l.b16 %v272
      %v385 = vunpack.c.l.b16 %v273
      %v386 = vunpack.c.l.b16 %v274
      %v387 = vunpack.c.l.b16 %v275
      %v388 = vunpack.c.l.b16 %v276
      %v389 = vunpack.c.l.b16 %v277
      %v390 = vpack.c.b16 %v295, %v382
      %v391 = vpack.c.b16 %v297, %v383
      %v392 = vpack.c.b16 %v299, %v384
      %v393 = vpack.c.b16 %v301, %v385
      %v394 = vpack.c.b16 %v303, %v386
      %v395 = vpack.c.b16 %v305, %v387
      %v396 = vpack.c.b16 %v307, %v388
      %v397 = vpack.c.b16 %v309, %v389
      %v398 = vrot.slane %v390, 1
      %v399 = vrot.slane %v391, 1
      %v400 = vrot.slane %v392, 1
      %v401 = vrot.slane %v393, 1
      %v402 = vrot.slane %v394, 1
      %v403 = vrot.slane %v395, 1
      %v404 = vrot.slane %v396, 1
      %v405 = vrot.slane %v397, 1
      %v406 = vunpack.c.l.b16 %v324
      %v407 = vunpack.c.l.b16 %v398
      %v408 = vunpack.c.l.b16 %v331
      %v409 = vunpack.c.l.b16 %v399
      %v410 = vunpack.c.l.b16 %v338
      %v411 = vunpack.c.l.b16 %v400
      %v412 = vunpack.c.l.b16 %v345
      %v413 = vunpack.c.l.b16 %v401
      %v414 = vunpack.c.l.b16 %v352
      %v415 = vunpack.c.l.b16 %v402
      %v416 = vunpack.c.l.b16 %v359
      %v417 = vunpack.c.l.b16 %v403
      %v418 = vunpack.c.l.b16 %v366
      %v419 = vunpack.c.l.b16 %v404
      %v420 = vunpack.c.l.b16 %v373
      %v421 = vunpack.c.l.b16 %v405
      %v422 = vld [vmem:[%s237] sm:$0xf]
      %v423 = vld [vmem:[%s237 + $0x4] sm:$0xf]
      %v424 = vld [vmem:[%s237 + $0x8] sm:$0xf]
      %v425 = vld [vmem:[%s237 + $0xc] sm:$0xf]
      %v426 = vld [vmem:[%s237 + $0x10] sm:$0xf]
      %v427 = vld [vmem:[%s237 + $0x14] sm:$0xf]
      %v428 = vld [vmem:[%s237 + $0x18] sm:$0xf]
      %v429 = vld [vmem:[%s237 + $0x1c] sm:$0xf]
      %v430 = vld [vmem:[%s237 + $0x20] sm:$0xf]
      %v431 = vld [vmem:[%s237 + $0x24] sm:$0xf]
      %v432 = vld [vmem:[%s237 + $0x28] sm:$0xf]
      %v433 = vld [vmem:[%s237 + $0x2c] sm:$0xf]
      %v434 = vld [vmem:[%s237 + $0x30] sm:$0xf]
      %v435 = vld [vmem:[%s237 + $0x34] sm:$0xf]
      %v436 = vld [vmem:[%s237 + $0x38] sm:$0xf]
      %v437 = vld [vmem:[%s237 + $0x3c] sm:$0xf]
      %v438 = vld [vmem:[%s237 + $0x40] sm:$0xf]
      %v439 = vld [vmem:[%s237 + $0x44] sm:$0xf]
      %v440 = vld [vmem:[%s237 + $0x48] sm:$0xf]
      %v441 = vld [vmem:[%s237 + $0x4c] sm:$0xf]
      %v442 = vld [vmem:[%s237 + $0x50] sm:$0xf]
      %v443 = vld [vmem:[%s237 + $0x54] sm:$0xf]
      %v444 = vld [vmem:[%s237 + $0x58] sm:$0xf]
      %v445 = vld [vmem:[%s237 + $0x5c] sm:$0xf]
      %v446 = vld [vmem:[%s237 + $0x60] sm:$0xf]
      %v447 = vld [vmem:[%s237 + $0x64] sm:$0xf]
      %v448 = vld [vmem:[%s237 + $0x68] sm:$0xf]
      %v449 = vld [vmem:[%s237 + $0x6c] sm:$0xf]
      %v450 = vld [vmem:[%s237 + $0x70] sm:$0xf]
      %v451 = vld [vmem:[%s237 + $0x74] sm:$0xf]
      %v452 = vld [vmem:[%s237 + $0x78] sm:$0xf]
      %v453 = vld [vmem:[%s237 + $0x7c] sm:$0xf]
      %v454 = vld [vmem:[%s237 + $0x80] sm:$0xf]
      %v455 = vld [vmem:[%s237 + $0x84] sm:$0xf]
      %v456 = vld [vmem:[%s237 + $0x88] sm:$0xf]
      %v457 = vld [vmem:[%s237 + $0x8c] sm:$0xf]
      %v458 = vld [vmem:[%s237 + $0x90] sm:$0xf]
      %v459 = vld [vmem:[%s237 + $0x94] sm:$0xf]
      %v460 = vld [vmem:[%s237 + $0x98] sm:$0xf]
      %v461 = vld [vmem:[%s237 + $0x9c] sm:$0xf]
      %v462 = vld [vmem:[%s237 + $0xa0] sm:$0xf]
      %v463 = vld [vmem:[%s237 + $0xa4] sm:$0xf]
      %v464 = vld [vmem:[%s237 + $0xa8] sm:$0xf]
      %v465 = vld [vmem:[%s237 + $0xac] sm:$0xf]
      %v466 = vld [vmem:[%s237 + $0xb0] sm:$0xf]
      %v467 = vld [vmem:[%s237 + $0xb4] sm:$0xf]
      %v468 = vld [vmem:[%s237 + $0xb8] sm:$0xf]
      %v469 = vld [vmem:[%s237 + $0xbc] sm:$0xf]
      %v470 = vpack.c.b16 %v296, %v294
      %v471 = vpack.c.b16 %v408, %v406
      %v472 = vpack.c.b16 %v409, %v407
      %v473 = vpack.c.b16 %v300, %v298
      %v474 = vpack.c.b16 %v412, %v410
      %v475 = vpack.c.b16 %v413, %v411
      %v476 = vpack.c.b16 %v304, %v302
      %v477 = vpack.c.b16 %v416, %v414
      %v478 = vpack.c.b16 %v417, %v415
      %v479 = vpack.c.b16 %v308, %v306
      %v480 = vpack.c.b16 %v420, %v418
      %v481 = vpack.c.b16 %v421, %v419
      %v542 = vunpack.c.l.b16 %v422
      %v543 = vunpack.c.l.b16 %v423
      %v544 = vunpack.c.l.b16 %v424
      %v545 = vunpack.c.l.b16 %v425
      %v546 = vunpack.c.l.b16 %v426
      %v547 = vunpack.c.l.b16 %v427
      %v548 = vunpack.c.l.b16 %v428
      %v549 = vunpack.c.l.b16 %v429
      %v550 = vunpack.c.l.b16 %v430
      %v551 = vunpack.c.l.b16 %v431
      %v552 = vunpack.c.l.b16 %v432
      %v553 = vunpack.c.l.b16 %v433
      %v554 = vunpack.c.l.b16 %v434
      %v555 = vunpack.c.l.b16 %v435
      %v556 = vunpack.c.l.b16 %v436
      %v557 = vunpack.c.l.b16 %v437
      %v558 = vunpack.c.l.b16 %v438
      %v559 = vunpack.c.l.b16 %v439
      %v560 = vunpack.c.l.b16 %v440
      %v561 = vunpack.c.l.b16 %v441
      %v562 = vunpack.c.l.b16 %v442
      %v563 = vunpack.c.l.b16 %v443
      %v564 = vunpack.c.l.b16 %v444
      %v565 = vunpack.c.l.b16 %v445
      %v566 = vunpack.c.l.b16 %v446
      %v567 = vunpack.c.l.b16 %v447
      %v568 = vunpack.c.l.b16 %v448
      %v569 = vunpack.c.l.b16 %v449
      %v570 = vunpack.c.l.b16 %v450
      %v571 = vunpack.c.l.b16 %v451
      %v572 = vunpack.c.l.b16 %v452
      %v573 = vunpack.c.l.b16 %v453
      %v574 = vunpack.c.l.b16 %v454
      %v575 = vunpack.c.l.b16 %v455
      %v576 = vunpack.c.l.b16 %v456
      %v577 = vunpack.c.l.b16 %v457
      %v578 = vunpack.c.l.b16 %v458
      %v579 = vunpack.c.l.b16 %v459
      %v580 = vunpack.c.l.b16 %v460
      %v581 = vunpack.c.l.b16 %v461
      %v582 = vunpack.c.l.b16 %v462
      %v583 = vunpack.c.l.b16 %v463
      %v584 = vunpack.c.l.b16 %v464
      %v585 = vunpack.c.l.b16 %v465
      %v586 = vunpack.c.l.b16 %v466
      %v587 = vunpack.c.l.b16 %v467
      %v588 = vunpack.c.l.b16 %v468
      %v589 = vunpack.c.l.b16 %v469
      %v590 = vpack.c.b16 %v543, %v542
      %v591 = vpack.c.b16 %v545, %v544
      %v592 = vpack.c.b16 %v547, %v546
      %v593 = vpack.c.b16 %v549, %v548
      %v594 = vpack.c.b16 %v551, %v550
      %v595 = vpack.c.b16 %v553, %v552
      %v596 = vpack.c.b16 %v555, %v554
      %v597 = vpack.c.b16 %v557, %v556
      %v598 = vpack.c.b16 %v559, %v558
      %v599 = vpack.c.b16 %v561, %v560
      %v600 = vpack.c.b16 %v563, %v562
      %v601 = vpack.c.b16 %v565, %v564
      %v602 = vpack.c.b16 %v567, %v566
      %v603 = vpack.c.b16 %v569, %v568
      %v604 = vpack.c.b16 %v571, %v570
      %v605 = vpack.c.b16 %v573, %v572
      %v606 = vpack.c.b16 %v575, %v574
      %v607 = vpack.c.b16 %v577, %v576
      %v608 = vpack.c.b16 %v579, %v578
      %v609 = vpack.c.b16 %v581, %v580
      %v610 = vpack.c.b16 %v583, %v582
      %v611 = vpack.c.b16 %v585, %v584
      %v612 = vpack.c.b16 %v587, %v586
      %v613 = vpack.c.b16 %v589, %v588
      %638 = vmatprep.subr.bf16.mxu0 0
      %639 = vmatpush1.bf16.msra.mxu0 %v590
      %640 = vmatprep.subr.bf16.mxu0 0
      %641 = vmatpush1.bf16.msra.mxu0 %v591
      %642 = vmatprep.subr.bf16.mxu0 0
      %643 = vmatpush1.bf16.msra.mxu0 %v592
      %644 = vmatprep.subr.bf16.mxu0 0
      %645 = vmatpush1.bf16.msra.mxu0 %v593
      %646 = vmatprep.subr.bf16.mxu0 0
      %647 = vmatpush1.bf16.msra.mxu0 %v594
      %648 = vmatprep.subr.bf16.mxu0 0
      %649 = vmatpush1.bf16.msra.mxu0 %v595
      %650 = vmatprep.subr.bf16.mxu0 0
      %651 = vmatpush1.bf16.msra.mxu0 %v596
      %652 = vmatprep.subr.bf16.mxu0 0
      %653 = vmatpush1.bf16.msra.mxu0 %v597
      %654 = vmatprep.subr.bf16.mxu0 0
      %655 = vmatpush1.bf16.msra.mxu0 %v598
      %656 = vmatprep.subr.bf16.mxu0 0
      %657 = vmatpush1.bf16.msra.mxu0 %v599
      %658 = vmatprep.subr.bf16.mxu0 0
      %659 = vmatpush1.bf16.msra.mxu0 %v600
      %660 = vmatprep.subr.bf16.mxu0 0
      %661 = vmatpush1.bf16.msra.mxu0 %v601
      %662 = vmatprep.subr.bf16.mxu0 0
      %663 = vmatpush1.bf16.msra.mxu0 %v602
      %664 = vmatprep.subr.bf16.mxu0 0
      %665 = vmatpush1.bf16.msra.mxu0 %v603
      %666 = vmatprep.subr.bf16.mxu0 0
      %667 = vmatpush1.bf16.msra.mxu0 %v604
      %668 = vmatprep.subr.bf16.mxu0 0
      %669 = vmatpush1.bf16.msra.mxu0 %v605
      %670 = vmatprep.mubr.bf16.mxu0 %v471
      %671 = vmatmul.mubr.bf16.gmra.mrb[0].mxu0 %v470
      %v672 = vpop.f32.mrb[0].mxu0
      %v673 = vadd.f32 0.0, %v672
      %v674 = vpop.f32.mrb[0].mxu0
      %v675 = vpop.f32.mrb[0].mxu0
      %v676 = vadd.f32 0.0, %v675
      %v677 = vpop.f32.mrb[0].mxu0
      %678 = vmatprep.mubr.bf16.mxu0 %v474
      %679 = vmatmul.mubr.bf16.gmra.mrb[0].mxu0 %v473
      %v680 = vpop.f32.mrb[0].mxu0
      %v681 = vadd.f32 0.0, %v680
      %v682 = vpop.f32.mrb[0].mxu0
      %v683 = vpop.f32.mrb[0].mxu0
      %v684 = vadd.f32 0.0, %v683
      %v685 = vpop.f32.mrb[0].mxu0
      %686 = vmatprep.mubr.bf16.mxu0 %v477
      %687 = vmatmul.mubr.bf16.gmra.mrb[0].mxu0 %v476
      %v688 = vpop.f32.mrb[0].mxu0
      %v689 = vadd.f32 0.0, %v688
      %v690 = vpop.f32.mrb[0].mxu0
      %v691 = vpop.f32.mrb[0].mxu0
      %v692 = vadd.f32 0.0, %v691
      %v693 = vpop.f32.mrb[0].mxu0
      %694 = vmatprep.mubr.bf16.mxu0 %v480
      %695 = vmatmul.mubr.bf16.gmra.mrb[0].mxu0 %v479
      %v696 = vpop.f32.mrb[0].mxu0
      %v697 = vadd.f32 0.0, %v696
      %v698 = vpop.f32.mrb[0].mxu0
      %v699 = vpop.f32.mrb[0].mxu0
      %v700 = vadd.f32 0.0, %v699
      %v701 = vpop.f32.mrb[0].mxu0
      %702 = vdwg.mxu0
      %703 = vmatprep.subr.bf16.mxu0 0
      %704 = vmatpush1.bf16.msra.mxu0 %v606
      %705 = vmatprep.subr.bf16.mxu0 0
      %706 = vmatpush1.bf16.msra.mxu0 %v607
      %707 = vmatprep.subr.bf16.mxu0 0
      %708 = vmatpush1.bf16.msra.mxu0 %v608
      %709 = vmatprep.subr.bf16.mxu0 0
      %710 = vmatpush1.bf16.msra.mxu0 %v609
      %711 = vmatprep.subr.bf16.mxu0 0
      %712 = vmatpush1.bf16.msra.mxu0 %v610
      %713 = vmatprep.subr.bf16.mxu0 0
      %714 = vmatpush1.bf16.msra.mxu0 %v611
      %715 = vmatprep.subr.bf16.mxu0 0
      %716 = vmatpush1.bf16.msra.mxu0 %v612
      %717 = vmatprep.subr.bf16.mxu0 0
      %718 = vmatpush1.bf16.msra.mxu0 %v613
      %719 = vmatprep.subr.bf16.mxu0 0
      %720 = vmatpush1.bf16.msra.mxu0 0
      %721 = vmatprep.subr.bf16.mxu0 0
      %722 = vmatpush1.bf16.msra.mxu0 0
      %723 = vmatprep.subr.bf16.mxu0 0
      %724 = vmatpush1.bf16.msra.mxu0 0
      %725 = vmatprep.subr.bf16.mxu0 0
      %726 = vmatpush1.bf16.msra.mxu0 0
      %727 = vmatprep.subr.bf16.mxu0 0
      %728 = vmatpush1.bf16.msra.mxu0 0
      %729 = vmatprep.subr.bf16.mxu0 0
      %730 = vmatpush1.bf16.msra.mxu0 0
      %731 = vmatprep.subr.bf16.mxu0 0
      %732 = vmatpush1.bf16.msra.mxu0 0
      %733 = vmatprep.subr.bf16.mxu0 0
      %734 = vmatpush1.bf16.msra.mxu0 0
      %735 = vmatprep.mubr.bf16.mxu0 0
      %736 = vmatmul.mubr.bf16.gmra.mrb[0].mxu0 %v472
      %v737 = vpop.f32.mrb[0].mxu0
      %v738 = vadd.f32 %v673, %v737
      %v739 = vpop.f32.mrb[0].mxu0
      %v740 = vpop.f32.mrb[0].mxu0
      %v741 = vadd.f32 %v676, %v740
      %v742 = vpop.f32.mrb[0].mxu0
      %743 = vmatprep.mubr.bf16.mxu0 0
      %744 = vmatmul.mubr.bf16.gmra.mrb[0].mxu0 %v475
      %v745 = vpop.f32.mrb[0].mxu0
      %v746 = vadd.f32 %v681, %v745
      %v747 = vpop.f32.mrb[0].mxu0
      %v748 = vpop.f32.mrb[0].mxu0
      %v749 = vadd.f32 %v684, %v748
      %v750 = vpop.f32.mrb[0].mxu0
      %751 = vmatprep.mubr.bf16.mxu0 0
      %752 = vmatmul.mubr.bf16.gmra.mrb[0].mxu0 %v478
      %v753 = vpop.f32.mrb[0].mxu0
      %v754 = vadd.f32 %v689, %v753
      %v755 = vpop.f32.mrb[0].mxu0
      %v756 = vpop.f32.mrb[0].mxu0
      %v757 = vadd.f32 %v692, %v756
      %v758 = vpop.f32.mrb[0].mxu0
      %759 = vmatprep.mubr.bf16.mxu0 0
      %760 = vmatmul.mubr.bf16.gmra.mrb[0].mxu0 %v481
      %v761 = vpop.f32.mrb[0].mxu0
      %v762 = vadd.f32 %v697, %v761
      %v763 = vpop.f32.mrb[0].mxu0
      %v764 = vpop.f32.mrb[0].mxu0
      %v765 = vadd.f32 %v700, %v764
      %v766 = vpop.f32.mrb[0].mxu0
      %767 = vdwg.mxu0
      %768 = vst [vmem:[#allocation2] sm:$0xff] %v738
      %769 = vst [vmem:[#allocation2 + $0x8] sm:$0xff] %v741
      %770 = vst [vmem:[#allocation2 + $0x10] sm:$0xff] %v746
      %771 = vst [vmem:[#allocation2 + $0x18] sm:$0xff] %v749
      %772 = vst [vmem:[#allocation2 + $0x20] sm:$0xff] %v754
      %773 = vst [vmem:[#allocation2 + $0x28] sm:$0xff] %v757
      %774 = vst [vmem:[#allocation2 + $0x30] sm:$0xff] %v762
      %775 = vst [vmem:[#allocation2 + $0x38] sm:$0xff] %v765
      %s776 = scalar_lea.vmem %s233, 8
      %v777 = vld [vmem:[%s776] sm:$0xf]
      %v778 = vld [vmem:[%s776 + $0x8] sm:$0xf]
      %v779 = vld [vmem:[%s776 + $0x10] sm:$0xf]
      %v780 = vld [vmem:[%s776 + $0x18] sm:$0xf]
      %v781 = vld [vmem:[%s776 + $0x20] sm:$0xf]
      %v782 = vld [vmem:[%s776 + $0x28] sm:$0xf]
      %v783 = vld [vmem:[%s776 + $0x30] sm:$0xf]
      %v784 = vld [vmem:[%s776 + $0x38] sm:$0xf]
      %v785 = vld [vmem:[%s776 + $0x4] sm:$0x1]
      %v786 = vld [vmem:[%s776 + $0xc] sm:$0x1]
      %v787 = vld [vmem:[%s776 + $0x14] sm:$0x1]
      %v788 = vld [vmem:[%s776 + $0x1c] sm:$0x1]
      %v789 = vld [vmem:[%s776 + $0x24] sm:$0x1]
      %v790 = vld [vmem:[%s776 + $0x2c] sm:$0x1]
      %v791 = vld [vmem:[%s776 + $0x34] sm:$0x1]
      %v792 = vld [vmem:[%s776 + $0x3c] sm:$0x1]
      %v793 = vld [vmem:[%s776] sm:$0xe]
      %v794 = vld [vmem:[%s776 + $0x8] sm:$0xe]
      %v795 = vld [vmem:[%s776 + $0x10] sm:$0xe]
      %v796 = vld [vmem:[%s776 + $0x18] sm:$0xe]
      %v797 = vld [vmem:[%s776 + $0x20] sm:$0xe]
      %v798 = vld [vmem:[%s776 + $0x28] sm:$0xe]
      %v799 = vld [vmem:[%s776 + $0x30] sm:$0xe]
      %v800 = vld [vmem:[%s776 + $0x38] sm:$0xe]
      %v817 = vunpack.c.l.b16 %v777
      %v818 = vunpack.c.l.b16 %v785
      %v819 = vunpack.c.l.b16 %v778
      %v820 = vunpack.c.l.b16 %v786
      %v821 = vunpack.c.l.b16 %v779
      %v822 = vunpack.c.l.b16 %v787
      %v823 = vunpack.c.l.b16 %v780
      %v824 = vunpack.c.l.b16 %v788
      %v825 = vunpack.c.l.b16 %v781
      %v826 = vunpack.c.l.b16 %v789
      %v827 = vunpack.c.l.b16 %v782
      %v828 = vunpack.c.l.b16 %v790
      %v829 = vunpack.c.l.b16 %v783
      %v830 = vunpack.c.l.b16 %v791
      %v831 = vunpack.c.l.b16 %v784
      %v832 = vunpack.c.l.b16 %v792
      %v833 = vpack.c.b16 %v818, %v817
      %v834 = vpack.c.b16 %v820, %v819
      %v835 = vpack.c.b16 %v822, %v821
      %v836 = vpack.c.b16 %v824, %v823
      %v837 = vpack.c.b16 %v826, %v825
      %v838 = vpack.c.b16 %v828, %v827
      %v839 = vpack.c.b16 %v830, %v829
      %v840 = vpack.c.b16 %v832, %v831
      %v842 = vshrl.u32 %v833, 16
      %v844 = vshll.u32 %v833, 16
      %v846 = vrot.slane %v844, 1
      %v847 = vor.u32 %v842, %v846
      %v849 = vshrl.u32 %v834, 16
      %v851 = vshll.u32 %v834, 16
      %v853 = vrot.slane %v851, 1
      %v854 = vor.u32 %v849, %v853
      %v856 = vshrl.u32 %v835, 16
      %v858 = vshll.u32 %v835, 16
      %v860 = vrot.slane %v858, 1
      %v861 = vor.u32 %v856, %v860
      %v863 = vshrl.u32 %v836, 16
      %v865 = vshll.u32 %v836, 16
      %v867 = vrot.slane %v865, 1
      %v868 = vor.u32 %v863, %v867
      %v870 = vshrl.u32 %v837, 16
      %v872 = vshll.u32 %v837, 16
      %v874 = vrot.slane %v872, 1
      %v875 = vor.u32 %v870, %v874
      %v877 = vshrl.u32 %v838, 16
      %v879 = vshll.u32 %v838, 16
      %v881 = vrot.slane %v879, 1
      %v882 = vor.u32 %v877, %v881
      %v884 = vshrl.u32 %v839, 16
      %v886 = vshll.u32 %v839, 16
      %v888 = vrot.slane %v886, 1
      %v889 = vor.u32 %v884, %v888
      %v891 = vshrl.u32 %v840, 16
      %v893 = vshll.u32 %v840, 16
      %v895 = vrot.slane %v893, 1
      %v896 = vor.u32 %v891, %v895
      %v905 = vunpack.c.l.b16 %v793
      %v906 = vunpack.c.l.b16 %v794
      %v907 = vunpack.c.l.b16 %v795
      %v908 = vunpack.c.l.b16 %v796
      %v909 = vunpack.c.l.b16 %v797
      %v910 = vunpack.c.l.b16 %v798
      %v911 = vunpack.c.l.b16 %v799
      %v912 = vunpack.c.l.b16 %v800
      %v913 = vpack.c.b16 %v818, %v905
      %v914 = vpack.c.b16 %v820, %v906
      %v915 = vpack.c.b16 %v822, %v907
      %v916 = vpack.c.b16 %v824, %v908
      %v917 = vpack.c.b16 %v826, %v909
      %v918 = vpack.c.b16 %v828, %v910
      %v919 = vpack.c.b16 %v830, %v911
      %v920 = vpack.c.b16 %v832, %v912
      %v921 = vrot.slane %v913, 1
      %v922 = vrot.slane %v914, 1
      %v923 = vrot.slane %v915, 1
      %v924 = vrot.slane %v916, 1
      %v925 = vrot.slane %v917, 1
      %v926 = vrot.slane %v918, 1
      %v927 = vrot.slane %v919, 1
      %v928 = vrot.slane %v920, 1
      %v929 = vunpack.c.l.b16 %v847
      %v930 = vunpack.c.l.b16 %v921
      %v931 = vunpack.c.l.b16 %v854
      %v932 = vunpack.c.l.b16 %v922
      %v933 = vunpack.c.l.b16 %v861
      %v934 = vunpack.c.l.b16 %v923
      %v935 = vunpack.c.l.b16 %v868
      %v936 = vunpack.c.l.b16 %v924
      %v937 = vunpack.c.l.b16 %v875
      %v938 = vunpack.c.l.b16 %v925
      %v939 = vunpack.c.l.b16 %v882
      %v940 = vunpack.c.l.b16 %v926
      %v941 = vunpack.c.l.b16 %v889
      %v942 = vunpack.c.l.b16 %v927
      %v943 = vunpack.c.l.b16 %v896
      %v944 = vunpack.c.l.b16 %v928
      %s945 = scalar_lea.vmem %s237, 192
      %v946 = vld [vmem:[%s945] sm:$0xf]
      %v947 = vld [vmem:[%s945 + $0x4] sm:$0xf]
      %v948 = vld [vmem:[%s945 + $0x8] sm:$0xf]
      %v949 = vld [vmem:[%s945 + $0xc] sm:$0xf]
      %v950 = vld [vmem:[%s945 + $0x10] sm:$0xf]
      %v951 = vld [vmem:[%s945 + $0x14] sm:$0xf]
      %v952 = vld [vmem:[%s945 + $0x18] sm:$0xf]
      %v953 = vld [vmem:[%s945 + $0x1c] sm:$0xf]
      %v954 = vld [vmem:[%s945 + $0x20] sm:$0xf]
      %v955 = vld [vmem:[%s945 + $0x24] sm:$0xf]
      %v956 = vld [vmem:[%s945 + $0x28] sm:$0xf]
      %v957 = vld [vmem:[%s945 + $0x2c] sm:$0xf]
      %v958 = vld [vmem:[%s945 + $0x30] sm:$0xf]
      %v959 = vld [vmem:[%s945 + $0x34] sm:$0xf]
      %v960 = vld [vmem:[%s945 + $0x38] sm:$0xf]
      %v961 = vld [vmem:[%s945 + $0x3c] sm:$0xf]
      %v962 = vld [vmem:[%s945 + $0x40] sm:$0xf]
      %v963 = vld [vmem:[%s945 + $0x44] sm:$0xf]
      %v964 = vld [vmem:[%s945 + $0x48] sm:$0xf]
      %v965 = vld [vmem:[%s945 + $0x4c] sm:$0xf]
      %v966 = vld [vmem:[%s945 + $0x50] sm:$0xf]
      %v967 = vld [vmem:[%s945 + $0x54] sm:$0xf]
      %v968 = vld [vmem:[%s945 + $0x58] sm:$0xf]
      %v969 = vld [vmem:[%s945 + $0x5c] sm:$0xf]
      %v970 = vld [vmem:[%s945 + $0x60] sm:$0xf]
      %v971 = vld [vmem:[%s945 + $0x64] sm:$0xf]
      %v972 = vld [vmem:[%s945 + $0x68] sm:$0xf]
      %v973 = vld [vmem:[%s945 + $0x6c] sm:$0xf]
      %v974 = vld [vmem:[%s945 + $0x70] sm:$0xf]
      %v975 = vld [vmem:[%s945 + $0x74] sm:$0xf]
      %v976 = vld [vmem:[%s945 + $0x78] sm:$0xf]
      %v977 = vld [vmem:[%s945 + $0x7c] sm:$0xf]
      %v978 = vld [vmem:[%s945 + $0x80] sm:$0xf]
      %v979 = vld [vmem:[%s945 + $0x84] sm:$0xf]
      %v980 = vld [vmem:[%s945 + $0x88] sm:$0xf]
      %v981 = vld [vmem:[%s945 + $0x8c] sm:$0xf]
      %v982 = vld [vmem:[%s945 + $0x90] sm:$0xf]
      %v983 = vld [vmem:[%s945 + $0x94] sm:$0xf]
      %v984 = vld [vmem:[%s945 + $0x98] sm:$0xf]
      %v985 = vld [vmem:[%s945 + $0x9c] sm:$0xf]
      %v986 = vld [vmem:[%s945 + $0xa0] sm:$0xf]
      %v987 = vld [vmem:[%s945 + $0xa4] sm:$0xf]
      %v988 = vld [vmem:[%s945 + $0xa8] sm:$0xf]
      %v989 = vld [vmem:[%s945 + $0xac] sm:$0xf]
      %v990 = vld [vmem:[%s945 + $0xb0] sm:$0xf]
      %v991 = vld [vmem:[%s945 + $0xb4] sm:$0xf]
      %v992 = vld [vmem:[%s945 + $0xb8] sm:$0xf]
      %v993 = vld [vmem:[%s945 + $0xbc] sm:$0xf]
      %v994 = vpack.c.b16 %v819, %v817
      %v995 = vpack.c.b16 %v931, %v929
      %v996 = vpack.c.b16 %v932, %v930
      %v997 = vpack.c.b16 %v823, %v821
      %v998 = vpack.c.b16 %v935, %v933
      %v999 = vpack.c.b16 %v936, %v934
      %v1000 = vpack.c.b16 %v827, %v825
      %v1001 = vpack.c.b16 %v939, %v937
      %v1002 = vpack.c.b16 %v940, %v938
      %v1003 = vpack.c.b16 %v831, %v829
      %v1004 = vpack.c.b16 %v943, %v941
      %v1005 = vpack.c.b16 %v944, %v942
      %v1066 = vunpack.c.l.b16 %v946
      %v1067 = vunpack.c.l.b16 %v947
      %v1068 = vunpack.c.l.b16 %v948
      %v1069 = vunpack.c.l.b16 %v949
      %v1070 = vunpack.c.l.b16 %v950
      %v1071 = vunpack.c.l.b16 %v951
      %v1072 = vunpack.c.l.b16 %v952
      %v1073 = vunpack.c.l.b16 %v953
      %v1074 = vunpack.c.l.b16 %v954
      %v1075 = vunpack.c.l.b16 %v955
      %v1076 = vunpack.c.l.b16 %v956
      %v1077 = vunpack.c.l.b16 %v957
      %v1078 = vunpack.c.l.b16 %v958
      %v1079 = vunpack.c.l.b16 %v959
      %v1080 = vunpack.c.l.b16 %v960
      %v1081 = vunpack.c.l.b16 %v961
      %v1082 = vunpack.c.l.b16 %v962
      %v1083 = vunpack.c.l.b16 %v963
      %v1084 = vunpack.c.l.b16 %v964
      %v1085 = vunpack.c.l.b16 %v965
      %v1086 = vunpack.c.l.b16 %v966
      %v1087 = vunpack.c.l.b16 %v967
      %v1088 = vunpack.c.l.b16 %v968
      %v1089 = vunpack.c.l.b16 %v969
      %v1090 = vunpack.c.l.b16 %v970
      %v1091 = vunpack.c.l.b16 %v971
      %v1092 = vunpack.c.l.b16 %v972
      %v1093 = vunpack.c.l.b16 %v973
      %v1094 = vunpack.c.l.b16 %v974
      %v1095 = vunpack.c.l.b16 %v975
      %v1096 = vunpack.c.l.b16 %v976
      %v1097 = vunpack.c.l.b16 %v977
      %v1098 = vunpack.c.l.b16 %v978
      %v1099 = vunpack.c.l.b16 %v979
      %v1100 = vunpack.c.l.b16 %v980
      %v1101 = vunpack.c.l.b16 %v981
      %v1102 = vunpack.c.l.b16 %v982
      %v1103 = vunpack.c.l.b16 %v983
      %v1104 = vunpack.c.l.b16 %v984
      %v1105 = vunpack.c.l.b16 %v985
      %v1106 = vunpack.c.l.b16 %v986
      %v1107 = vunpack.c.l.b16 %v987
      %v1108 = vunpack.c.l.b16 %v988
      %v1109 = vunpack.c.l.b16 %v989
      %v1110 = vunpack.c.l.b16 %v990
      %v1111 = vunpack.c.l.b16 %v991
      %v1112 = vunpack.c.l.b16 %v992
      %v1113 = vunpack.c.l.b16 %v993
      %v1114 = vpack.c.b16 %v1067, %v1066
      %v1115 = vpack.c.b16 %v1069, %v1068
      %v1116 = vpack.c.b16 %v1071, %v1070
      %v1117 = vpack.c.b16 %v1073, %v1072
      %v1118 = vpack.c.b16 %v1075, %v1074
      %v1119 = vpack.c.b16 %v1077, %v1076
      %v1120 = vpack.c.b16 %v1079, %v1078
      %v1121 = vpack.c.b16 %v1081, %v1080
      %v1122 = vpack.c.b16 %v1083, %v1082
      %v1123 = vpack.c.b16 %v1085, %v1084
      %v1124 = vpack.c.b16 %v1087, %v1086
      %v1125 = vpack.c.b16 %v1089, %v1088
      %v1126 = vpack.c.b16 %v1091, %v1090
      %v1127 = vpack.c.b16 %v1093, %v1092
      %v1128 = vpack.c.b16 %v1095, %v1094
      %v1129 = vpack.c.b16 %v1097, %v1096
      %v1130 = vpack.c.b16 %v1099, %v1098
      %v1131 = vpack.c.b16 %v1101, %v1100
      %v1132 = vpack.c.b16 %v1103, %v1102
      %v1133 = vpack.c.b16 %v1105, %v1104
      %v1134 = vpack.c.b16 %v1107, %v1106
      %v1135 = vpack.c.b16 %v1109, %v1108
      %v1136 = vpack.c.b16 %v1111, %v1110
      %v1137 = vpack.c.b16 %v1113, %v1112
      %1162 = vmatprep.subr.bf16.mxu0 0
      %1163 = vmatpush1.bf16.msra.mxu0 %v1114
      %1164 = vmatprep.subr.bf16.mxu0 0
      %1165 = vmatpush1.bf16.msra.mxu0 %v1115
      %1166 = vmatprep.subr.bf16.mxu0 0
      %1167 = vmatpush1.bf16.msra.mxu0 %v1116
      %1168 = vmatprep.subr.bf16.mxu0 0
      %1169 = vmatpush1.bf16.msra.mxu0 %v1117
      %1170 = vmatprep.subr.bf16.mxu0 0
      %1171 = vmatpush1.bf16.msra.mxu0 %v1118
      %1172 = vmatprep.subr.bf16.mxu0 0
      %1173 = vmatpush1.bf16.msra.mxu0 %v1119
      %1174 = vmatprep.subr.bf16.mxu0 0
      %1175 = vmatpush1.bf16.msra.mxu0 %v1120
      %1176 = vmatprep.subr.bf16.mxu0 0
      %1177 = vmatpush1.bf16.msra.mxu0 %v1121
      %1178 = vmatprep.subr.bf16.mxu0 0
      %1179 = vmatpush1.bf16.msra.mxu0 %v1122
      %1180 = vmatprep.subr.bf16.mxu0 0
      %1181 = vmatpush1.bf16.msra.mxu0 %v1123
      %1182 = vmatprep.subr.bf16.mxu0 0
      %1183 = vmatpush1.bf16.msra.mxu0 %v1124
      %1184 = vmatprep.subr.bf16.mxu0 0
      %1185 = vmatpush1.bf16.msra.mxu0 %v1125
      %1186 = vmatprep.subr.bf16.mxu0 0
      %1187 = vmatpush1.bf16.msra.mxu0 %v1126
      %1188 = vmatprep.subr.bf16.mxu0 0
      %1189 = vmatpush1.bf16.msra.mxu0 %v1127
      %1190 = vmatprep.subr.bf16.mxu0 0
      %1191 = vmatpush1.bf16.msra.mxu0 %v1128
      %1192 = vmatprep.subr.bf16.mxu0 0
      %1193 = vmatpush1.bf16.msra.mxu0 %v1129
      %1194 = vmatprep.mubr.bf16.mxu0 %v995
      %1195 = vmatmul.mubr.bf16.gmra.mrb[0].mxu0 %v994
      %v1196 = vpop.f32.mrb[0].mxu0
      %v1197 = vadd.f32 0.0, %v1196
      %v1198 = vpop.f32.mrb[0].mxu0
      %v1199 = vpop.f32.mrb[0].mxu0
      %v1200 = vadd.f32 0.0, %v1199
      %v1201 = vpop.f32.mrb[0].mxu0
      %1202 = vmatprep.mubr.bf16.mxu0 %v998
      %1203 = vmatmul.mubr.bf16.gmra.mrb[0].mxu0 %v997
      %v1204 = vpop.f32.mrb[0].mxu0
      %v1205 = vadd.f32 0.0, %v1204
      %v1206 = vpop.f32.mrb[0].mxu0
      %v1207 = vpop.f32.mrb[0].mxu0
      %v1208 = vadd.f32 0.0, %v1207
      %v1209 = vpop.f32.mrb[0].mxu0
      %1210 = vmatprep.mubr.bf16.mxu0 %v1001
      %1211 = vmatmul.mubr.bf16.gmra.mrb[0].mxu0 %v1000
      %v1212 = vpop.f32.mrb[0].mxu0
      %v1213 = vadd.f32 0.0, %v1212
      %v1214 = vpop.f32.mrb[0].mxu0
      %v1215 = vpop.f32.mrb[0].mxu0
      %v1216 = vadd.f32 0.0, %v1215
      %v1217 = vpop.f32.mrb[0].mxu0
      %1218 = vmatprep.mubr.bf16.mxu0 %v1004
      %1219 = vmatmul.mubr.bf16.gmra.mrb[0].mxu0 %v1003
      %v1220 = vpop.f32.mrb[0].mxu0
      %v1221 = vadd.f32 0.0, %v1220
      %v1222 = vpop.f32.mrb[0].mxu0
      %v1223 = vpop.f32.mrb[0].mxu0
      %v1224 = vadd.f32 0.0, %v1223
      %v1225 = vpop.f32.mrb[0].mxu0
      %1226 = vdwg.mxu0
      %1227 = vmatprep.subr.bf16.mxu0 0
      %1228 = vmatpush1.bf16.msra.mxu0 %v1130
      %1229 = vmatprep.subr.bf16.mxu0 0
      %1230 = vmatpush1.bf16.msra.mxu0 %v1131
      %1231 = vmatprep.subr.bf16.mxu0 0
      %1232 = vmatpush1.bf16.msra.mxu0 %v1132
      %1233 = vmatprep.subr.bf16.mxu0 0
      %1234 = vmatpush1.bf16.msra.mxu0 %v1133
      %1235 = vmatprep.subr.bf16.mxu0 0
      %1236 = vmatpush1.bf16.msra.mxu0 %v1134
      %1237 = vmatprep.subr.bf16.mxu0 0
      %1238 = vmatpush1.bf16.msra.mxu0 %v1135
      %1239 = vmatprep.subr.bf16.mxu0 0
      %1240 = vmatpush1.bf16.msra.mxu0 %v1136
      %1241 = vmatprep.subr.bf16.mxu0 0
      %1242 = vmatpush1.bf16.msra.mxu0 %v1137
      %1243 = vmatprep.subr.bf16.mxu0 0
      %1244 = vmatpush1.bf16.msra.mxu0 0
      %1245 = vmatprep.subr.bf16.mxu0 0
      %1246 = vmatpush1.bf16.msra.mxu0 0
      %1247 = vmatprep.subr.bf16.mxu0 0
      %1248 = vmatpush1.bf16.msra.mxu0 0
      %1249 = vmatprep.subr.bf16.mxu0 0
      %1250 = vmatpush1.bf16.msra.mxu0 0
      %1251 = vmatprep.subr.bf16.mxu0 0
      %1252 = vmatpush1.bf16.msra.mxu0 0
      %1253 = vmatprep.subr.bf16.mxu0 0
      %1254 = vmatpush1.bf16.msra.mxu0 0
      %1255 = vmatprep.subr.bf16.mxu0 0
      %1256 = vmatpush1.bf16.msra.mxu0 0
      %1257 = vmatprep.subr.bf16.mxu0 0
      %1258 = vmatpush1.bf16.msra.mxu0 0
      %1259 = vmatprep.mubr.bf16.mxu0 0
      %1260 = vmatmul.mubr.bf16.gmra.mrb[0].mxu0 %v996
      %v1261 = vpop.f32.mrb[0].mxu0
      %v1262 = vadd.f32 %v1197, %v1261
      %v1263 = vpop.f32.mrb[0].mxu0
      %v1264 = vpop.f32.mrb[0].mxu0
      %v1265 = vadd.f32 %v1200, %v1264
      %v1266 = vpop.f32.mrb[0].mxu0
      %1267 = vmatprep.mubr.bf16.mxu0 0
      %1268 = vmatmul.mubr.bf16.gmra.mrb[0].mxu0 %v999
      %v1269 = vpop.f32.mrb[0].mxu0
      %v1270 = vadd.f32 %v1205, %v1269
      %v1271 = vpop.f32.mrb[0].mxu0
      %v1272 = vpop.f32.mrb[0].mxu0
      %v1273 = vadd.f32 %v1208, %v1272
      %v1274 = vpop.f32.mrb[0].mxu0
      %1275 = vmatprep.mubr.bf16.mxu0 0
      %1276 = vmatmul.mubr.bf16.gmra.mrb[0].mxu0 %v1002
      %v1277 = vpop.f32.mrb[0].mxu0
      %v1278 = vadd.f32 %v1213, %v1277
      %v1279 = vpop.f32.mrb[0].mxu0
      %v1280 = vpop.f32.mrb[0].mxu0
      %v1281 = vadd.f32 %v1216, %v1280
      %v1282 = vpop.f32.mrb[0].mxu0
      %1283 = vmatprep.mubr.bf16.mxu0 0
      %1284 = vmatmul.mubr.bf16.gmra.mrb[0].mxu0 %v1005
      %v1285 = vpop.f32.mrb[0].mxu0
      %v1286 = vadd.f32 %v1221, %v1285
      %v1287 = vpop.f32.mrb[0].mxu0
      %v1288 = vpop.f32.mrb[0].mxu0
      %v1289 = vadd.f32 %v1224, %v1288
      %v1290 = vpop.f32.mrb[0].mxu0
      %1291 = vdwg.mxu0
      %v1292 = vld [vmem:[#allocation2] sm:$0xff]
      %v1293 = vld [vmem:[#allocation2 + $0x8] sm:$0xff]
      %v1294 = vld [vmem:[#allocation2 + $0x10] sm:$0xff]
      %v1295 = vld [vmem:[#allocation2 + $0x18] sm:$0xff]
      %v1296 = vld [vmem:[#allocation2 + $0x20] sm:$0xff]
      %v1297 = vld [vmem:[#allocation2 + $0x28] sm:$0xff]
      %v1298 = vld [vmem:[#allocation2 + $0x30] sm:$0xff]
      %v1299 = vld [vmem:[#allocation2 + $0x38] sm:$0xff]
      %v1300 = vadd.f32 %v1292, %v1262
      %v1301 = vadd.f32 %v1293, %v1265
      %v1302 = vadd.f32 %v1294, %v1270
      %v1303 = vadd.f32 %v1295, %v1273
      %v1304 = vadd.f32 %v1296, %v1278
      %v1305 = vadd.f32 %v1297, %v1281
      %v1306 = vadd.f32 %v1298, %v1286
      %v1307 = vadd.f32 %v1299, %v1289
      %1308 = vst [vmem:[#allocation2] sm:$0xff] %v1300
      %1309 = vst [vmem:[#allocation2 + $0x8] sm:$0xff] %v1301
      %1310 = vst [vmem:[#allocation2 + $0x10] sm:$0xff] %v1302
      %1311 = vst [vmem:[#allocation2 + $0x18] sm:$0xff] %v1303
      %1312 = vst [vmem:[#allocation2 + $0x20] sm:$0xff] %v1304
      %1313 = vst [vmem:[#allocation2 + $0x28] sm:$0xff] %v1305
      %1314 = vst [vmem:[#allocation2 + $0x30] sm:$0xff] %v1306
      %1315 = vst [vmem:[#allocation2 + $0x38] sm:$0xff] %v1307
      %s1316 = scalar_lea.vmem %s233, 16
      %v1317 = vld [vmem:[%s1316] sm:$0xf]
      %v1318 = vld [vmem:[%s1316 + $0x8] sm:$0xf]
      %v1319 = vld [vmem:[%s1316 + $0x10] sm:$0xf]
      %v1320 = vld [vmem:[%s1316 + $0x18] sm:$0xf]
      %v1321 = vld [vmem:[%s1316 + $0x20] sm:$0xf]
      %v1322 = vld [vmem:[%s1316 + $0x28] sm:$0xf]
      %v1323 = vld [vmem:[%s1316 + $0x30] sm:$0xf]
      %v1324 = vld [vmem:[%s1316 + $0x38] sm:$0xf]
      %v1325 = vld [vmem:[%s1316 + $0x4] sm:$0x1]
      %v1326 = vld [vmem:[%s1316 + $0xc] sm:$0x1]
      %v1327 = vld [vmem:[%s1316 + $0x14] sm:$0x1]
      %v1328 = vld [vmem:[%s1316 + $0x1c] sm:$0x1]
      %v1329 = vld [vmem:[%s1316 + $0x24] sm:$0x1]
      %v1330 = vld [vmem:[%s1316 + $0x2c] sm:$0x1]
      %v1331 = vld [vmem:[%s1316 + $0x34] sm:$0x1]
      %v1332 = vld [vmem:[%s1316 + $0x3c] sm:$0x1]
      %v1333 = vld [vmem:[%s1316] sm:$0xe]
      %v1334 = vld [vmem:[%s1316 + $0x8] sm:$0xe]
      %v1335 = vld [vmem:[%s1316 + $0x10] sm:$0xe]
      %v1336 = vld [vmem:[%s1316 + $0x18] sm:$0xe]
      %v1337 = vld [vmem:[%s1316 + $0x20] sm:$0xe]
      %v1338 = vld [vmem:[%s1316 + $0x28] sm:$0xe]
      %v1339 = vld [vmem:[%s1316 + $0x30] sm:$0xe]
      %v1340 = vld [vmem:[%s1316 + $0x38] sm:$0xe]
      %v1357 = vunpack.c.l.b16 %v1317
      %v1358 = vunpack.c.l.b16 %v1325
      %v1359 = vunpack.c.l.b16 %v1318
      %v1360 = vunpack.c.l.b16 %v1326
      %v1361 = vunpack.c.l.b16 %v1319
      %v1362 = vunpack.c.l.b16 %v1327
      %v1363 = vunpack.c.l.b16 %v1320
      %v1364 = vunpack.c.l.b16 %v1328
      %v1365 = vunpack.c.l.b16 %v1321
      %v1366 = vunpack.c.l.b16 %v1329
      %v1367 = vunpack.c.l.b16 %v1322
      %v1368 = vunpack.c.l.b16 %v1330
      %v1369 = vunpack.c.l.b16 %v1323
      %v1370 = vunpack.c.l.b16 %v1331
      %v1371 = vunpack.c.l.b16 %v1324
      %v1372 = vunpack.c.l.b16 %v1332
      %v1373 = vpack.c.b16 %v1358, %v1357
      %v1374 = vpack.c.b16 %v1360, %v1359
      %v1375 = vpack.c.b16 %v1362, %v1361
      %v1376 = vpack.c.b16 %v1364, %v1363
      %v1377 = vpack.c.b16 %v1366, %v1365
      %v1378 = vpack.c.b16 %v1368, %v1367
      %v1379 = vpack.c.b16 %v1370, %v1369
      %v1380 = vpack.c.b16 %v1372, %v1371
      %v1382 = vshrl.u32 %v1373, 16
      %v1384 = vshll.u32 %v1373, 16
      %v1386 = vrot.slane %v1384, 1
      %v1387 = vor.u32 %v1382, %v1386
      %v1389 = vshrl.u32 %v1374, 16
      %v1391 = vshll.u32 %v1374, 16
      %v1393 = vrot.slane %v1391, 1
      %v1394 = vor.u32 %v1389, %v1393
      %v1396 = vshrl.u32 %v1375, 16
      %v1398 = vshll.u32 %v1375, 16
      %v1400 = vrot.slane %v1398, 1
      %v1401 = vor.u32 %v1396, %v1400
      %v1403 = vshrl.u32 %v1376, 16
      %v1405 = vshll.u32 %v1376, 16
      %v1407 = vrot.slane %v1405, 1
      %v1408 = vor.u32 %v1403, %v1407
      %v1410 = vshrl.u32 %v1377, 16
      %v1412 = vshll.u32 %v1377, 16
      %v1414 = vrot.slane %v1412, 1
      %v1415 = vor.u32 %v1410, %v1414
      %v1417 = vshrl.u32 %v1378, 16
      %v1419 = vshll.u32 %v1378, 16
      %v1421 = vrot.slane %v1419, 1
      %v1422 = vor.u32 %v1417, %v1421
      %v1424 = vshrl.u32 %v1379, 16
      %v1426 = vshll.u32 %v1379, 16
      %v1428 = vrot.slane %v1426, 1
      %v1429 = vor.u32 %v1424, %v1428
      %v1431 = vshrl.u32 %v1380, 16
      %v1433 = vshll.u32 %v1380, 16
      %v1435 = vrot.slane %v1433, 1
      %v1436 = vor.u32 %v1431, %v1435
      %v1445 = vunpack.c.l.b16 %v1333
      %v1446 = vunpack.c.l.b16 %v1334
      %v1447 = vunpack.c.l.b16 %v1335
      %v1448 = vunpack.c.l.b16 %v1336
      %v1449 = vunpack.c.l.b16 %v1337
      %v1450 = vunpack.c.l.b16 %v1338
      %v1451 = vunpack.c.l.b16 %v1339
      %v1452 = vunpack.c.l.b16 %v1340
      %v1453 = vpack.c.b16 %v1358, %v1445
      %v1454 = vpack.c.b16 %v1360, %v1446
      %v1455 = vpack.c.b16 %v1362, %v1447
      %v1456 = vpack.c.b16 %v1364, %v1448
      %v1457 = vpack.c.b16 %v1366, %v1449
      %v1458 = vpack.c.b16 %v1368, %v1450
      %v1459 = vpack.c.b16 %v1370, %v1451
      %v1460 = vpack.c.b16 %v1372, %v1452
      %v1461 = vrot.slane %v1453, 1
      %v1462 = vrot.slane %v1454, 1
      %v1463 = vrot.slane %v1455, 1
      %v1464 = vrot.slane %v1456, 1
      %v1465 = vrot.slane %v1457, 1
      %v1466 = vrot.slane %v1458, 1
      %v1467 = vrot.slane %v1459, 1
      %v1468 = vrot.slane %v1460, 1
      %v1469 = vunpack.c.l.b16 %v1387
      %v1470 = vunpack.c.l.b16 %v1461
      %v1471 = vunpack.c.l.b16 %v1394
      %v1472 = vunpack.c.l.b16 %v1462
      %v1473 = vunpack.c.l.b16 %v1401
      %v1474 = vunpack.c.l.b16 %v1463
      %v1475 = vunpack.c.l.b16 %v1408
      %v1476 = vunpack.c.l.b16 %v1464
      %v1477 = vunpack.c.l.b16 %v1415
      %v1478 = vunpack.c.l.b16 %v1465
      %v1479 = vunpack.c.l.b16 %v1422
      %v1480 = vunpack.c.l.b16 %v1466
      %v1481 = vunpack.c.l.b16 %v1429
      %v1482 = vunpack.c.l.b16 %v1467
      %v1483 = vunpack.c.l.b16 %v1436
      %v1484 = vunpack.c.l.b16 %v1468
      %s1485 = scalar_lea.vmem %s237, 384
      %v1486 = vld [vmem:[%s1485] sm:$0xf]
      %v1487 = vld [vmem:[%s1485 + $0x4] sm:$0xf]
      %v1488 = vld [vmem:[%s1485 + $0x8] sm:$0xf]
      %v1489 = vld [vmem:[%s1485 + $0xc] sm:$0xf]
      %v1490 = vld [vmem:[%s1485 + $0x10] sm:$0xf]
      %v1491 = vld [vmem:[%s1485 + $0x14] sm:$0xf]
      %v1492 = vld [vmem:[%s1485 + $0x18] sm:$0xf]
      %v1493 = vld [vmem:[%s1485 + $0x1c] sm:$0xf]
      %v1494 = vld [vmem:[%s1485 + $0x20] sm:$0xf]
      %v1495 = vld [vmem:[%s1485 + $0x24] sm:$0xf]
      %v1496 = vld [vmem:[%s1485 + $0x28] sm:$0xf]
      %v1497 = vld [vmem:[%s1485 + $0x2c] sm:$0xf]
      %v1498 = vld [vmem:[%s1485 + $0x30] sm:$0xf]
      %v1499 = vld [vmem:[%s1485 + $0x34] sm:$0xf]
      %v1500 = vld [vmem:[%s1485 + $0x38] sm:$0xf]
      %v1501 = vld [vmem:[%s1485 + $0x3c] sm:$0xf]
      %v1502 = vld [vmem:[%s1485 + $0x40] sm:$0xf]
      %v1503 = vld [vmem:[%s1485 + $0x44] sm:$0xf]
      %v1504 = vld [vmem:[%s1485 + $0x48] sm:$0xf]
      %v1505 = vld [vmem:[%s1485 + $0x4c] sm:$0xf]
      %v1506 = vld [vmem:[%s1485 + $0x50] sm:$0xf]
      %v1507 = vld [vmem:[%s1485 + $0x54] sm:$0xf]
      %v1508 = vld [vmem:[%s1485 + $0x58] sm:$0xf]
      %v1509 = vld [vmem:[%s1485 + $0x5c] sm:$0xf]
      %v1510 = vld [vmem:[%s1485 + $0x60] sm:$0xf]
      %v1511 = vld [vmem:[%s1485 + $0x64] sm:$0xf]
      %v1512 = vld [vmem:[%s1485 + $0x68] sm:$0xf]
      %v1513 = vld [vmem:[%s1485 + $0x6c] sm:$0xf]
      %v1514 = vld [vmem:[%s1485 + $0x70] sm:$0xf]
      %v1515 = vld [vmem:[%s1485 + $0x74] sm:$0xf]
      %v1516 = vld [vmem:[%s1485 + $0x78] sm:$0xf]
      %v1517 = vld [vmem:[%s1485 + $0x7c] sm:$0xf]
      %v1518 = vld [vmem:[%s1485 + $0x80] sm:$0xf]
      %v1519 = vld [vmem:[%s1485 + $0x84] sm:$0xf]
      %v1520 = vld [vmem:[%s1485 + $0x88] sm:$0xf]
      %v1521 = vld [vmem:[%s1485 + $0x8c] sm:$0xf]
      %v1522 = vld [vmem:[%s1485 + $0x90] sm:$0xf]
      %v1523 = vld [vmem:[%s1485 + $0x94] sm:$0xf]
      %v1524 = vld [vmem:[%s1485 + $0x98] sm:$0xf]
      %v1525 = vld [vmem:[%s1485 + $0x9c] sm:$0xf]
      %v1526 = vld [vmem:[%s1485 + $0xa0] sm:$0xf]
      %v1527 = vld [vmem:[%s1485 + $0xa4] sm:$0xf]
      %v1528 = vld [vmem:[%s1485 + $0xa8] sm:$0xf]
      %v1529 = vld [vmem:[%s1485 + $0xac] sm:$0xf]
      %v1530 = vld [vmem:[%s1485 + $0xb0] sm:$0xf]
      %v1531 = vld [vmem:[%s1485 + $0xb4] sm:$0xf]
      %v1532 = vld [vmem:[%s1485 + $0xb8] sm:$0xf]
      %v1533 = vld [vmem:[%s1485 + $0xbc] sm:$0xf]
      %v1534 = vpack.c.b16 %v1359, %v1357
      %v1535 = vpack.c.b16 %v1471, %v1469
      %v1536 = vpack.c.b16 %v1472, %v1470
      %v1537 = vpack.c.b16 %v1363, %v1361
      %v1538 = vpack.c.b16 %v1475, %v1473
      %v1539 = vpack.c.b16 %v1476, %v1474
      %v1540 = vpack.c.b16 %v1367, %v1365
      %v1541 = vpack.c.b16 %v1479, %v1477
      %v1542 = vpack.c.b16 %v1480, %v1478
      %v1543 = vpack.c.b16 %v1371, %v1369
      %v1544 = vpack.c.b16 %v1483, %v1481
      %v1545 = vpack.c.b16 %v1484, %v1482
      %v1606 = vunpack.c.l.b16 %v1486
      %v1607 = vunpack.c.l.b16 %v1487
      %v1608 = vunpack.c.l.b16 %v1488
      %v1609 = vunpack.c.l.b16 %v1489
      %v1610 = vunpack.c.l.b16 %v1490
      %v1611 = vunpack.c.l.b16 %v1491
      %v1612 = vunpack.c.l.b16 %v1492
      %v1613 = vunpack.c.l.b16 %v1493
      %v1614 = vunpack.c.l.b16 %v1494
      %v1615 = vunpack.c.l.b16 %v1495
      %v1616 = vunpack.c.l.b16 %v1496
      %v1617 = vunpack.c.l.b16 %v1497
      %v1618 = vunpack.c.l.b16 %v1498
      %v1619 = vunpack.c.l.b16 %v1499
      %v1620 = vunpack.c.l.b16 %v1500
      %v1621 = vunpack.c.l.b16 %v1501
      %v1622 = vunpack.c.l.b16 %v1502
      %v1623 = vunpack.c.l.b16 %v1503
      %v1624 = vunpack.c.l.b16 %v1504
      %v1625 = vunpack.c.l.b16 %v1505
      %v1626 = vunpack.c.l.b16 %v1506
      %v1627 = vunpack.c.l.b16 %v1507
      %v1628 = vunpack.c.l.b16 %v1508
      %v1629 = vunpack.c.l.b16 %v1509
      %v1630 = vunpack.c.l.b16 %v1510
      %v1631 = vunpack.c.l.b16 %v1511
      %v1632 = vunpack.c.l.b16 %v1512
      %v1633 = vunpack.c.l.b16 %v1513
      %v1634 = vunpack.c.l.b16 %v1514
      %v1635 = vunpack.c.l.b16 %v1515
      %v1636 = vunpack.c.l.b16 %v1516
      %v1637 = vunpack.c.l.b16 %v1517
      %v1638 = vunpack.c.l.b16 %v1518
      %v1639 = vunpack.c.l.b16 %v1519
      %v1640 = vunpack.c.l.b16 %v1520
      %v1641 = vunpack.c.l.b16 %v1521
      %v1642 = vunpack.c.l.b16 %v1522
      %v1643 = vunpack.c.l.b16 %v1523
      %v1644 = vunpack.c.l.b16 %v1524
      %v1645 = vunpack.c.l.b16 %v1525
      %v1646 = vunpack.c.l.b16 %v1526
      %v1647 = vunpack.c.l.b16 %v1527
      %v1648 = vunpack.c.l.b16 %v1528
      %v1649 = vunpack.c.l.b16 %v1529
      %v1650 = vunpack.c.l.b16 %v1530
      %v1651 = vunpack.c.l.b16 %v1531
      %v1652 = vunpack.c.l.b16 %v1532
      %v1653 = vunpack.c.l.b16 %v1533
      %v1654 = vpack.c.b16 %v1607, %v1606
      %v1655 = vpack.c.b16 %v1609, %v1608
      %v1656 = vpack.c.b16 %v1611, %v1610
      %v1657 = vpack.c.b16 %v1613, %v1612
      %v1658 = vpack.c.b16 %v1615, %v1614
      %v1659 = vpack.c.b16 %v1617, %v1616
      %v1660 = vpack.c.b16 %v1619, %v1618
      %v1661 = vpack.c.b16 %v1621, %v1620
      %v1662 = vpack.c.b16 %v1623, %v1622
      %v1663 = vpack.c.b16 %v1625, %v1624
      %v1664 = vpack.c.b16 %v1627, %v1626
      %v1665 = vpack.c.b16 %v1629, %v1628
      %v1666 = vpack.c.b16 %v1631, %v1630
      %v1667 = vpack.c.b16 %v1633, %v1632
      %v1668 = vpack.c.b16 %v1635, %v1634
      %v1669 = vpack.c.b16 %v1637, %v1636
      %v1670 = vpack.c.b16 %v1639, %v1638
      %v1671 = vpack.c.b16 %v1641, %v1640
      %v1672 = vpack.c.b16 %v1643, %v1642
      %v1673 = vpack.c.b16 %v1645, %v1644
      %v1674 = vpack.c.b16 %v1647, %v1646
      %v1675 = vpack.c.b16 %v1649, %v1648
      %v1676 = vpack.c.b16 %v1651, %v1650
      %v1677 = vpack.c.b16 %v1653, %v1652
      %1702 = vmatprep.subr.bf16.mxu0 0
      %1703 = vmatpush1.bf16.msra.mxu0 %v1654
      %1704 = vmatprep.subr.bf16.mxu0 0
      %1705 = vmatpush1.bf16.msra.mxu0 %v1655
      %1706 = vmatprep.subr.bf16.mxu0 0
      %1707 = vmatpush1.bf16.msra.mxu0 %v1656
      %1708 = vmatprep.subr.bf16.mxu0 0
      %1709 = vmatpush1.bf16.msra.mxu0 %v1657
      %1710 = vmatprep.subr.bf16.mxu0 0
      %1711 = vmatpush1.bf16.msra.mxu0 %v1658
      %1712 = vmatprep.subr.bf16.mxu0 0
      %1713 = vmatpush1.bf16.msra.mxu0 %v1659
      %1714 = vmatprep.subr.bf16.mxu0 0
      %1715 = vmatpush1.bf16.msra.mxu0 %v1660
      %1716 = vmatprep.subr.bf16.mxu0 0
      %1717 = vmatpush1.bf16.msra.mxu0 %v1661
      %1718 = vmatprep.subr.bf16.mxu0 0
      %1719 = vmatpush1.bf16.msra.mxu0 %v1662
      %1720 = vmatprep.subr.bf16.mxu0 0
      %1721 = vmatpush1.bf16.msra.mxu0 %v1663
      %1722 = vmatprep.subr.bf16.mxu0 0
      %1723 = vmatpush1.bf16.msra.mxu0 %v1664
      %1724 = vmatprep.subr.bf16.mxu0 0
      %1725 = vmatpush1.bf16.msra.mxu0 %v1665
      %1726 = vmatprep.subr.bf16.mxu0 0
      %1727 = vmatpush1.bf16.msra.mxu0 %v1666
      %1728 = vmatprep.subr.bf16.mxu0 0
      %1729 = vmatpush1.bf16.msra.mxu0 %v1667
      %1730 = vmatprep.subr.bf16.mxu0 0
      %1731 = vmatpush1.bf16.msra.mxu0 %v1668
      %1732 = vmatprep.subr.bf16.mxu0 0
      %1733 = vmatpush1.bf16.msra.mxu0 %v1669
      %1734 = vmatprep.mubr.bf16.mxu0 %v1535
      %1735 = vmatmul.mubr.bf16.gmra.mrb[0].mxu0 %v1534
      %v1736 = vpop.f32.mrb[0].mxu0
      %v1737 = vadd.f32 0.0, %v1736
      %v1738 = vpop.f32.mrb[0].mxu0
      %v1739 = vpop.f32.mrb[0].mxu0
      %v1740 = vadd.f32 0.0, %v1739
      %v1741 = vpop.f32.mrb[0].mxu0
      %1742 = vmatprep.mubr.bf16.mxu0 %v1538
      %1743 = vmatmul.mubr.bf16.gmra.mrb[0].mxu0 %v1537
      %v1744 = vpop.f32.mrb[0].mxu0
      %v1745 = vadd.f32 0.0, %v1744
      %v1746 = vpop.f32.mrb[0].mxu0
      %v1747 = vpop.f32.mrb[0].mxu0
      %v1748 = vadd.f32 0.0, %v1747
      %v1749 = vpop.f32.mrb[0].mxu0
      %1750 = vmatprep.mubr.bf16.mxu0 %v1541
      %1751 = vmatmul.mubr.bf16.gmra.mrb[0].mxu0 %v1540
      %v1752 = vpop.f32.mrb[0].mxu0
      %v1753 = vadd.f32 0.0, %v1752
      %v1754 = vpop.f32.mrb[0].mxu0
      %v1755 = vpop.f32.mrb[0].mxu0
      %v1756 = vadd.f32 0.0, %v1755
      %v1757 = vpop.f32.mrb[0].mxu0
      %1758 = vmatprep.mubr.bf16.mxu0 %v1544
      %1759 = vmatmul.mubr.bf16.gmra.mrb[0].mxu0 %v1543
      %v1760 = vpop.f32.mrb[0].mxu0
      %v1761 = vadd.f32 0.0, %v1760
      %v1762 = vpop.f32.mrb[0].mxu0
      %v1763 = vpop.f32.mrb[0].mxu0
      %v1764 = vadd.f32 0.0, %v1763
      %v1765 = vpop.f32.mrb[0].mxu0
      %1766 = vdwg.mxu0
      %1767 = vmatprep.subr.bf16.mxu0 0
      %1768 = vmatpush1.bf16.msra.mxu0 %v1670
      %1769 = vmatprep.subr.bf16.mxu0 0
      %1770 = vmatpush1.bf16.msra.mxu0 %v1671
      %1771 = vmatprep.subr.bf16.mxu0 0
      %1772 = vmatpush1.bf16.msra.mxu0 %v1672
      %1773 = vmatprep.subr.bf16.mxu0 0
      %1774 = vmatpush1.bf16.msra.mxu0 %v1673
      %1775 = vmatprep.subr.bf16.mxu0 0
      %1776 = vmatpush1.bf16.msra.mxu0 %v1674
      %1777 = vmatprep.subr.bf16.mxu0 0
      %1778 = vmatpush1.bf16.msra.mxu0 %v1675
      %1779 = vmatprep.subr.bf16.mxu0 0
      %1780 = vmatpush1.bf16.msra.mxu0 %v1676
      %1781 = vmatprep.subr.bf16.mxu0 0
      %1782 = vmatpush1.bf16.msra.mxu0 %v1677
      %1783 = vmatprep.subr.bf16.mxu0 0
      %1784 = vmatpush1.bf16.msra.mxu0 0
      %1785 = vmatprep.subr.bf16.mxu0 0
      %1786 = vmatpush1.bf16.msra.mxu0 0
      %1787 = vmatprep.subr.bf16.mxu0 0
      %1788 = vmatpush1.bf16.msra.mxu0 0
      %1789 = vmatprep.subr.bf16.mxu0 0
      %1790 = vmatpush1.bf16.msra.mxu0 0
      %1791 = vmatprep.subr.bf16.mxu0 0
      %1792 = vmatpush1.bf16.msra.mxu0 0
      %1793 = vmatprep.subr.bf16.mxu0 0
      %1794 = vmatpush1.bf16.msra.mxu0 0
      %1795 = vmatprep.subr.bf16.mxu0 0
      %1796 = vmatpush1.bf16.msra.mxu0 0
      %1797 = vmatprep.subr.bf16.mxu0 0
      %1798 = vmatpush1.bf16.msra.mxu0 0
      %1799 = vmatprep.mubr.bf16.mxu0 0
      %1800 = vmatmul.mubr.bf16.gmra.mrb[0].mxu0 %v1536
      %v1801 = vpop.f32.mrb[0].mxu0
      %v1802 = vadd.f32 %v1737, %v1801
      %v1803 = vpop.f32.mrb[0].mxu0
      %v1804 = vpop.f32.mrb[0].mxu0
      %v1805 = vadd.f32 %v1740, %v1804
      %v1806 = vpop.f32.mrb[0].mxu0
      %1807 = vmatprep.mubr.bf16.mxu0 0
      %1808 = vmatmul.mubr.bf16.gmra.mrb[0].mxu0 %v1539
      %v1809 = vpop.f32.mrb[0].mxu0
      %v1810 = vadd.f32 %v1745, %v1809
      %v1811 = vpop.f32.mrb[0].mxu0
      %v1812 = vpop.f32.mrb[0].mxu0
      %v1813 = vadd.f32 %v1748, %v1812
      %v1814 = vpop.f32.mrb[0].mxu0
      %1815 = vmatprep.mubr.bf16.mxu0 0
      %1816 = vmatmul.mubr.bf16.gmra.mrb[0].mxu0 %v1542
      %v1817 = vpop.f32.mrb[0].mxu0
      %v1818 = vadd.f32 %v1753, %v1817
      %v1819 = vpop.f32.mrb[0].mxu0
      %v1820 = vpop.f32.mrb[0].mxu0
      %v1821 = vadd.f32 %v1756, %v1820
      %v1822 = vpop.f32.mrb[0].mxu0
      %1823 = vmatprep.mubr.bf16.mxu0 0
      %1824 = vmatmul.mubr.bf16.gmra.mrb[0].mxu0 %v1545
      %v1825 = vpop.f32.mrb[0].mxu0
      %v1826 = vadd.f32 %v1761, %v1825
      %v1827 = vpop.f32.mrb[0].mxu0
      %v1828 = vpop.f32.mrb[0].mxu0
      %v1829 = vadd.f32 %v1764, %v1828
      %v1830 = vpop.f32.mrb[0].mxu0
      %1831 = vdwg.mxu0
      %v1832 = vld [vmem:[#allocation2] sm:$0xff]
      %v1833 = vld [vmem:[#allocation2 + $0x8] sm:$0xff]
      %v1834 = vld [vmem:[#allocation2 + $0x10] sm:$0xff]
      %v1835 = vld [vmem:[#allocation2 + $0x18] sm:$0xff]
      %v1836 = vld [vmem:[#allocation2 + $0x20] sm:$0xff]
      %v1837 = vld [vmem:[#allocation2 + $0x28] sm:$0xff]
      %v1838 = vld [vmem:[#allocation2 + $0x30] sm:$0xff]
      %v1839 = vld [vmem:[#allocation2 + $0x38] sm:$0xff]
      %v1840 = vadd.f32 %v1832, %v1802
      %v1841 = vadd.f32 %v1833, %v1805
      %v1842 = vadd.f32 %v1834, %v1810
      %v1843 = vadd.f32 %v1835, %v1813
      %v1844 = vadd.f32 %v1836, %v1818
      %v1845 = vadd.f32 %v1837, %v1821
      %v1846 = vadd.f32 %v1838, %v1826
      %v1847 = vadd.f32 %v1839, %v1829
      %1848 = vst [vmem:[#allocation2] sm:$0xff] %v1840
      %1849 = vst [vmem:[#allocation2 + $0x8] sm:$0xff] %v1841
      %1850 = vst [vmem:[#allocation2 + $0x10] sm:$0xff] %v1842
      %1851 = vst [vmem:[#allocation2 + $0x18] sm:$0xff] %v1843
      %1852 = vst [vmem:[#allocation2 + $0x20] sm:$0xff] %v1844
      %1853 = vst [vmem:[#allocation2 + $0x28] sm:$0xff] %v1845
      %1854 = vst [vmem:[#allocation2 + $0x30] sm:$0xff] %v1846
      %1855 = vst [vmem:[#allocation2 + $0x38] sm:$0xff] %v1847
      %v1856 = vld [vmem:[#allocation2] sm:$0xff]
      %v1857 = vld [vmem:[#allocation2 + $0x8] sm:$0xff]
      %v1858 = vld [vmem:[#allocation2 + $0x10] sm:$0xff]
      %v1859 = vld [vmem:[#allocation2 + $0x18] sm:$0xff]
      %v1860 = vld [vmem:[#allocation2 + $0x20] sm:$0xff]
      %v1861 = vld [vmem:[#allocation2 + $0x28] sm:$0xff]
      %v1862 = vld [vmem:[#allocation2 + $0x30] sm:$0xff]
      %v1863 = vld [vmem:[#allocation2 + $0x38] sm:$0xff]
      %v1864 = vld [vmem:[%s240] sm:$0x1]
      %v1866 = vlaneseq
      %v1867 = vshrl.u32 %v1866, 7
      %v1868 = vsub.s32 0, %v1867
      %v1869 = vrot.slane %v1864, %v1868
      %v1871 = vadd.f32 %v1856, %v1869
      %v1872 = vadd.f32 %v1857, %v1869
      %v1873 = vadd.f32 %v1858, %v1869
      %v1874 = vadd.f32 %v1859, %v1869
      %v1875 = vadd.f32 %v1860, %v1869
      %v1876 = vadd.f32 %v1861, %v1869
      %v1877 = vadd.f32 %v1862, %v1869
      %v1878 = vadd.f32 %v1863, %v1869
      %v1879 = vpack.c.bf16 %v1872, %v1871
      %v1880 = vpack.c.bf16 %v1874, %v1873
      %v1881 = vpack.c.bf16 %v1876, %v1875
      %v1882 = vpack.c.bf16 %v1878, %v1877
      %v1887 = vunpack.c.l.b16 %v1879
      %v1888 = vunpack.c.h.b16 %v1879
      %v1889 = vunpack.c.l.b16 %v1880
      %v1890 = vunpack.c.h.b16 %v1880
      %v1891 = vunpack.c.l.b16 %v1881
      %v1892 = vunpack.c.h.b16 %v1881
      %v1893 = vunpack.c.l.b16 %v1882
      %v1894 = vunpack.c.h.b16 %v1882
      %v1895 = vpack.c.b16 %v1887, %v1887
      %v1896 = vpack.c.b16 %v1888, %v1888
      %v1897 = vpack.c.b16 %v1889, %v1889
      %v1898 = vpack.c.b16 %v1890, %v1890
      %v1899 = vpack.c.b16 %v1891, %v1891
      %v1900 = vpack.c.b16 %v1892, %v1892
      %v1901 = vpack.c.b16 %v1893, %v1893
      %v1902 = vpack.c.b16 %v1894, %v1894
      %1911 = vst [vmem:[%s252] sm:$0xf] %v1895
      %1912 = vst [vmem:[%s252 + $0x4] sm:$0xf] %v1896
      %1913 = vst [vmem:[%s252 + $0x8] sm:$0xf] %v1897
      %1914 = vst [vmem:[%s252 + $0xc] sm:$0xf] %v1898
      %1915 = vst [vmem:[%s252 + $0x10] sm:$0xf] %v1899
      %1916 = vst [vmem:[%s252 + $0x14] sm:$0xf] %v1900
      %1917 = vst [vmem:[%s252 + $0x18] sm:$0xf] %v1901
      %1918 = vst [vmem:[%s252 + $0x1c] sm:$0xf] %v1902
      %p1919 = scmp.lt.s32.totalorder %s20, 1
      %s1920 = scalar_select %p1919, %s20, 1
      %p1921 = scmp.lt.s32.totalorder %s21, 0
      %s1922 = scalar_select %p1921, %s21, 0
      %p1923 = scmp.lt.s32.totalorder %s19, 0
      %s1924 = scalar_select %p1923, %s19, 0
      %s1925 = smul.addr %s1922, 8
      %s1926 = sadd.s32 %s1924, %s1925
      %s1927 = smul.addr %s1920, 8
      %s1928 = sadd.s32 %s1926, %s1927
      %s1929 = smul.addr %s1928, 4
      %s1930 = scalar_lea.vmem %s3, %s1929
      // Predicated region
      $region33: #{encoder_head_5x5.1} parent=31 // pred_check
        %p1931 = pneg %p135
      $region34: #{encoder_head_5x5.1} parent=31 // pred_check_branch
        %1933 = sbr.rel (%p1931) target = $region36
      $region35: #{encoder_head_5x5.1} parent=31 // pred_region
        _
      $region36: #{encoder_head_5x5.1} parent=31 // pred_fallthru
        _
    $region32: #{encoder_head_5x5.1} parent=5 // pred_fallthru
      _
    %p1934 = scmp.le.s32.totalorder 2, %s9
    // Predicated region
    $region37: #{encoder_head_5x5.1} parent=5 // pred_check
      %p1935 = pneg %p1934
    $region38: #{encoder_head_5x5.1} parent=5 // pred_check_branch
      %1937 = sbr.rel (%p1935) target = $region40
    $region39: #{encoder_head_5x5.1} parent=5 // pred_region
      %s1938 = ssub.s32 %s9, 2
      // Predicated region
      $region41: #{encoder_head_5x5.1} parent=39 // pred_check
        %p1939 = pneg %p141
      $region42: #{encoder_head_5x5.1} parent=39 // pred_check_branch
        %1941 = sbr.rel (%p1939) target = $region44
      $region43: #{encoder_head_5x5.1} parent=39 // pred_region
        %p1942 = scmp.lt.s32.totalorder %s23, 1
        %s1943 = scalar_select %p1942, %s23, 1
        %p1944 = scmp.lt.s32.totalorder %s24, 0
        %s1945 = scalar_select %p1944, %s24, 0
        %p1946 = scmp.lt.s32.totalorder %s22, 0
        %s1947 = scalar_select %p1946, %s22, 0
        %s1948 = smul.addr %s1945, 8
        %s1949 = sadd.s32 %s1947, %s1948
        %s1950 = smul.addr %s1943, 8
        %s1951 = sadd.s32 %s1949, %s1950
        %s1952 = smul.addr %s1951, 4
        %s1953 = scalar_lea.vmem %s3, %s1952
      $region44: #{encoder_head_5x5.1} parent=39 // pred_fallthru
        _
    $region40: #{encoder_head_5x5.1} parent=5 // pred_fallthru
      _
  $region6: #{encoder_head_5x5.1} parent=0 // loop_footer
    %s13 = sadd.s32 1, %s9
  $region7: #{encoder_head_5x5.1} parent=0 // loop_footer_branch
    %8 = sbr.rel target = $region3
  $region8: #{encoder_head_5x5.1} parent=0 // loop_exit
    _

</llo_original>
